<compile_context>
chip_gen: v5e
topology: v5e:2x2
jax: 0.10.0
libtpu: 0.0.40
codegen_flags: <defaults>
</compile_context>

<pallas_src>
import jax
import jax.numpy as jnp
from jax.experimental import pallas as pl
from jax.experimental.pallas import tpu as pltpu


def graphsage_net_kernel(a_ref, x_ref,
                         wl1_ref, wr1_ref, b1_ref,
                         wl2_ref, wr2_ref, b2_ref,
                         wl3_ref, wr3_ref, b3_ref,
                         wl4_ref, wr4_ref, b4_ref,
                         wfc_ref, bfc_ref,
                         out_ref):
    a = a_ref[...]          # (cN, cN) bf16 block-diagonal row-normalized aggregation
    h = x_ref[...]          # (cN, IN_CH) bf16 node features (batch flattened)

    def sage_agg_first(h, wl, wr, b):
        # out = (A @ h) @ Wl + h @ Wr + b   (no lane concat; two small matmuls)
        agg = jnp.dot(a, h, preferred_element_type=jnp.float32).astype(jnp.bfloat16)
        return (jnp.dot(agg, wl, preferred_element_type=jnp.float32)
                + jnp.dot(h, wr, preferred_element_type=jnp.float32)
                + b)

    def sage_proj_first(h, wl, wr, b):
        # out = A @ (h @ Wl) + h @ Wr + b   (project first when fan_out < fan_in)
        proj_l = jnp.dot(h, wl, preferred_element_type=jnp.float32).astype(jnp.bfloat16)
        proj_r = jnp.dot(h, wr, preferred_element_type=jnp.float32)
        return jnp.dot(a, proj_l, preferred_element_type=jnp.float32) + proj_r + b

    def relu_bf16(h):
        return jnp.maximum(h.astype(jnp.bfloat16), 0.0)

    # conv1 = GraphSAGE(in_channels, hidden_channels, num_layers=2)
    h = relu_bf16(sage_agg_first(h, wl1_ref[...], wr1_ref[...], b1_ref[...]))
    h = sage_agg_first(h, wl2_ref[...], wr2_ref[...], b2_ref[...])

    # outer relu; dropout is identity at inference
    # TODO(synk): training-mode dropout (nn.Dropout(0.5)) not modeled; eval semantics.
    h = relu_bf16(h)

    # conv2 = GraphSAGE(hidden_channels, out_channels, num_layers=2)
    h = relu_bf16(sage_proj_first(h, wl3_ref[...], wr3_ref[...], b3_ref[...]))
    h = sage_agg_first(h, wl4_ref[...], wr4_ref[...], b4_ref[...]).astype(jnp.bfloat16)

    # fc = Linear(out_channels, 2) padded to 128 lanes (unmasked lane-dense store)
    out_ref[...] = (jnp.dot(h, wfc_ref[...], preferred_element_type=jnp.float32)
                    + bfc_ref[...]).astype(jnp.bfloat16)


def _default_num_chunks(batch):
    """1 step on v5e/v6e (single TensorCore); 2 parallel steps on v7x (2 TCs)."""
    try:
        kind = jax.devices()[0].device_kind.lower()
    except Exception:
        kind = ""
    return 2 if ("v7" in kind and batch % 2 == 0) else 1


def graphsage_net_forward(a_norm, x, params, *, num_chunks=None):
    """a_norm: [B, N, N] row-normalized adjacency; x: [B, N, in_ch] features.

    params: (Wl1, Wr1, b1, ..., Wl4, Wr4, b4, Wfc_pad, bfc_pad)
    Returns logits [B, N, 2] (f32).
    """
    b, n, in_ch = x.shape
    if num_chunks is None:
        num_chunks = _default_num_chunks(b)
    gpc = b // num_chunks          # graphs per chunk
    cn = gpc * n                   # flattened node rows per chunk

    # Block-diagonal aggregation matrix per chunk: [num_chunks, cn, cn].
    a_resh = a_norm.reshape(num_chunks, gpc, n, n)
    a_bd = jnp.zeros((num_chunks, cn, cn), jnp.float32)
    for g in range(gpc):
        a_bd = a_bd.at[:, g * n:(g + 1) * n, g * n:(g + 1) * n].set(a_resh[:, g])
    a_bd = a_bd.astype(jnp.bfloat16)

    x_flat = x.reshape(num_chunks, cn, in_ch).astype(jnp.bfloat16)

    def per_chunk(shape):
        # one chunk per grid step; leading chunk dim squeezed out of the ref
        return pl.BlockSpec((None,) + shape, lambda i: (i, 0, 0))

    def pinned(arr):
        # whole weight resident; constant block index => no re-DMA per step
        return pl.BlockSpec(arr.shape, lambda i: (0,) * arr.ndim)

    weight_specs = [pinned(w) for w in params]

    out_padded = pl.pallas_call(
        graphsage_net_kernel,
        out_shape=jax.ShapeDtypeStruct((num_chunks, cn, 128), jnp.bfloat16),
        grid=(num_chunks,),
        in_specs=[per_chunk((cn, cn)),        # block-diagonal A, one chunk per step
                  per_chunk((cn, in_ch))      # flattened features
                  ] + weight_specs,
        out_specs=per_chunk((cn, 128)),
        compiler_params=pltpu.CompilerParams(
            dimension_semantics=("parallel",),
            vmem_limit_bytes=32 * 1024 * 1024),
    )(a_bd, x_flat, *params)

    # drop lane padding (only the first 2 columns are real logits), un-flatten batch
    logits = out_padded[:, :, :2].astype(jnp.float32)
    return logits.reshape(b, n, 2)


def make_params(key, in_channels, hidden_channels, out_channels):
    """Deterministic synthetic parameters.

    Per SAGEConv layer: separate Wl (neighbor) / Wr (root) matrices stored as
    [fan_in, fan_out] (h @ W == PyTorch h @ W.T), plus a [1, fan_out] bias.
    fc weights/bias padded to 128 output columns for a lane-dense store.
    """
    dims = [
        (in_channels, hidden_channels),       # conv1 / SAGEConv 1  (agg-first)
        (hidden_channels, hidden_channels),   # conv1 / SAGEConv 2  (agg-first)
        (hidden_channels, out_channels),      # conv2 / SAGEConv 1  (proj-first)
        (out_channels, out_channels),         # conv2 / SAGEConv 2  (agg-first)
    ]
    params = []
    for fan_in, fan_out in dims:
        key, k1, k2 = jax.random.split(key, 3)
        wl = 0.1 * jax.random.normal(k1, (fan_in, fan_out), jnp.float32)
        wr = 0.1 * jax.random.normal(k2, (fan_in, fan_out), jnp.float32)
        bl = jnp.zeros((1, fan_out), jnp.float32)
        params += [wl.astype(jnp.bfloat16), wr.astype(jnp.bfloat16), bl]

    key, kfc = jax.random.split(key)
    wfc = 0.1 * jax.random.normal(kfc, (out_channels, 2), jnp.float32)
    bfc = jnp.zeros((1, 2), jnp.float32)
    wfc_p = jnp.zeros((out_channels, 128), jnp.float32).at[:, :2].set(wfc)
    bfc_p = jnp.zeros((1, 128), jnp.float32).at[:, :2].set(bfc)
    params += [wfc_p.astype(jnp.bfloat16), bfc_p]
    return tuple(params)


def build_adjacency(edge_index, num_nodes):
    """Dense row-normalized aggregation matrix for mean-aggregation SAGEConv."""
    src = edge_index[0]
    dst = edge_index[1]
    a = jnp.zeros((num_nodes, num_nodes), jnp.float32).at[dst, src].add(1.0)
    deg = jnp.sum(a, axis=1, keepdims=True)
    return a / jnp.maximum(deg, 1.0)


if __name__ == "__main__":
    B = 8             # graphs per batch (flattened to one 128-row slab)
    N = 16            # nodes per graph
    IN_CH = 8         # in_channels
    HID = 32          # hidden_channels
    OUT_CH = 16       # out_channels

    key = jax.random.PRNGKey(0)
    key, kx = jax.random.split(key)

    # Node features [B, N, IN_CH]
    x = jax.random.normal(kx, (B, N, IN_CH), jnp.float32)

    # Deterministic per-graph edge_index [2, E]: bidirectional ring + chords.
    ring_src = list(range(N)) + [(i + 1) % N for i in range(N)]
    ring_dst = [(i + 1) % N for i in range(N)] + list(range(N))
    adjs = []
    for g in range(B):
        chord_src = [(3 * i + g) % N for i in range(6)]
        chord_dst = [(7 * i + 2 * g + 5) % N for i in range(6)]
        edge_index = jnp.array([ring_src + chord_src, ring_dst + chord_dst],
                               dtype=jnp.int32)
        adjs.append(build_adjacency(edge_index, N))
    a_norm = jnp.stack(adjs, axis=0)            # [B, N, N]

    params = make_params(key, IN_CH, HID, OUT_CH)

    out = graphsage_net_forward(a_norm, x, params)
    out = jax.block_until_ready(out)
    assert out.shape == (B, N, 2) and out.dtype == jnp.float32
    print("KERNEL_OK")
</pallas_src>

<mosaic_0001>
module attributes {stable_mosaic.version = 11 : i64} {
  func.func @graphsage_net_kernel(%arg0: i32, %arg1: memref<1x128x128xbf16, #tpu.memory_space<vmem>>, %arg2: memref<1x128x8xbf16, #tpu.memory_space<vmem>>, %arg3: memref<8x32xbf16, #tpu.memory_space<vmem>>, %arg4: memref<8x32xbf16, #tpu.memory_space<vmem>>, %arg5: memref<1x32xf32, #tpu.memory_space<vmem>>, %arg6: memref<32x32xbf16, #tpu.memory_space<vmem>>, %arg7: memref<32x32xbf16, #tpu.memory_space<vmem>>, %arg8: memref<1x32xf32, #tpu.memory_space<vmem>>, %arg9: memref<32x16xbf16, #tpu.memory_space<vmem>>, %arg10: memref<32x16xbf16, #tpu.memory_space<vmem>>, %arg11: memref<1x16xf32, #tpu.memory_space<vmem>>, %arg12: memref<16x16xbf16, #tpu.memory_space<vmem>>, %arg13: memref<16x16xbf16, #tpu.memory_space<vmem>>, %arg14: memref<1x16xf32, #tpu.memory_space<vmem>>, %arg15: memref<16x128xbf16, #tpu.memory_space<vmem>>, %arg16: memref<1x128xf32, #tpu.memory_space<vmem>>, %arg17: memref<1x128x128xbf16, #tpu.memory_space<vmem>>) attributes {dimension_semantics = [#tpu.dimension_semantics<parallel>], iteration_bounds = array<i64: 1>, scalar_prefetch = 0 : i64, scratch_operands = 0 : i64, tpu.core_type = #tpu.core_type<tc>, window_params = [{transform_indices = @transform_0, window_bounds = array<i64: 1, 128, 128>}, {transform_indices = @transform_1, window_bounds = array<i64: 1, 128, 8>}, {pipeline_mode = #tpu.pipeline_mode<synchronous>, transform_indices = @transform_2, window_bounds = array<i64: 8, 32>}, {pipeline_mode = #tpu.pipeline_mode<synchronous>, transform_indices = @transform_3, window_bounds = array<i64: 8, 32>}, {pipeline_mode = #tpu.pipeline_mode<synchronous>, transform_indices = @transform_4, window_bounds = array<i64: 1, 32>}, {pipeline_mode = #tpu.pipeline_mode<synchronous>, transform_indices = @transform_5, window_bounds = array<i64: 32, 32>}, {pipeline_mode = #tpu.pipeline_mode<synchronous>, transform_indices = @transform_6, window_bounds = array<i64: 32, 32>}, {pipeline_mode = #tpu.pipeline_mode<synchronous>, transform_indices = @transform_7, window_bounds = array<i64: 1, 32>}, {pipeline_mode = #tpu.pipeline_mode<synchronous>, transform_indices = @transform_8, window_bounds = array<i64: 32, 16>}, {pipeline_mode = #tpu.pipeline_mode<synchronous>, transform_indices = @transform_9, window_bounds = array<i64: 32, 16>}, {pipeline_mode = #tpu.pipeline_mode<synchronous>, transform_indices = @transform_10, window_bounds = array<i64: 1, 16>}, {pipeline_mode = #tpu.pipeline_mode<synchronous>, transform_indices = @transform_11, window_bounds = array<i64: 16, 16>}, {pipeline_mode = #tpu.pipeline_mode<synchronous>, transform_indices = @transform_12, window_bounds = array<i64: 16, 16>}, {pipeline_mode = #tpu.pipeline_mode<synchronous>, transform_indices = @transform_13, window_bounds = array<i64: 1, 16>}, {pipeline_mode = #tpu.pipeline_mode<synchronous>, transform_indices = @transform_14, window_bounds = array<i64: 16, 128>}, {pipeline_mode = #tpu.pipeline_mode<synchronous>, transform_indices = @transform_15, window_bounds = array<i64: 1, 128>}, {transform_indices = @transform_16, window_bounds = array<i64: 1, 128, 128>}]} {
    %c0 = arith.constant 0 : index
    %c0_0 = arith.constant 0 : index
    %c0_1 = arith.constant 0 : index
    %0 = vector.load %arg1[%c0, %c0_0, %c0_1] : memref<1x128x128xbf16, #tpu.memory_space<vmem>>, vector<1x128x128xbf16>
    %1 = vector.shape_cast %0 : vector<1x128x128xbf16> to vector<128x128xbf16>
    %c0_2 = arith.constant 0 : index
    %c0_3 = arith.constant 0 : index
    %c0_4 = arith.constant 0 : index
    %2 = vector.load %arg2[%c0_2, %c0_3, %c0_4] : memref<1x128x8xbf16, #tpu.memory_space<vmem>>, vector<1x128x8xbf16>
    %3 = vector.shape_cast %2 : vector<1x128x8xbf16> to vector<128x8xbf16>
    %c0_5 = arith.constant 0 : index
    %c0_6 = arith.constant 0 : index
    %4 = vector.load %arg3[%c0_5, %c0_6] : memref<8x32xbf16, #tpu.memory_space<vmem>>, vector<8x32xbf16>
    %c0_7 = arith.constant 0 : index
    %c0_8 = arith.constant 0 : index
    %5 = vector.load %arg4[%c0_7, %c0_8] : memref<8x32xbf16, #tpu.memory_space<vmem>>, vector<8x32xbf16>
    %c0_9 = arith.constant 0 : index
    %c0_10 = arith.constant 0 : index
    %6 = vector.load %arg5[%c0_9, %c0_10] : memref<1x32xf32, #tpu.memory_space<vmem>>, vector<1x32xf32>
    %cst = arith.constant dense<0.000000e+00> : vector<128x8xf32>
    %7 = tpu.matmul %1, %3, %cst {dimension_numbers = #tpu.dot_dimension_numbers<[1], [0], [0], [1], [0, 0, 1, 1], [], []>} : vector<128x128xbf16>, vector<128x8xbf16>, vector<128x8xf32> -> vector<128x8xf32>
    %8 = arith.truncf %7 : vector<128x8xf32> to vector<128x8xbf16>
    %cst_11 = arith.constant dense<0.000000e+00> : vector<128x32xf32>
    %9 = tpu.matmul %8, %4, %cst_11 {dimension_numbers = #tpu.dot_dimension_numbers<[1], [0], [0], [1], [0, 0, 1, 1], [], []>} : vector<128x8xbf16>, vector<8x32xbf16>, vector<128x32xf32> -> vector<128x32xf32>
    %cst_12 = arith.constant dense<0.000000e+00> : vector<128x32xf32>
    %10 = tpu.matmul %3, %5, %cst_12 {dimension_numbers = #tpu.dot_dimension_numbers<[1], [0], [0], [1], [0, 0, 1, 1], [], []>} : vector<128x8xbf16>, vector<8x32xbf16>, vector<128x32xf32> -> vector<128x32xf32>
    %11 = arith.addf %9, %10 : vector<128x32xf32>
    %12 = vector.broadcast %6 : vector<1x32xf32> to vector<128x32xf32>
    %13 = arith.addf %11, %12 : vector<128x32xf32>
    %14 = arith.truncf %13 : vector<128x32xf32> to vector<128x32xbf16>
    %cst_13 = arith.constant 0.000000e+00 : bf16
    %15 = vector.broadcast %cst_13 : bf16 to vector<128x32xbf16>
    %16 = arith.maximumf %14, %15 : vector<128x32xbf16>
    %c0_14 = arith.constant 0 : index
    %c0_15 = arith.constant 0 : index
    %17 = vector.load %arg6[%c0_14, %c0_15] : memref<32x32xbf16, #tpu.memory_space<vmem>>, vector<32x32xbf16>
    %c0_16 = arith.constant 0 : index
    %c0_17 = arith.constant 0 : index
    %18 = vector.load %arg7[%c0_16, %c0_17] : memref<32x32xbf16, #tpu.memory_space<vmem>>, vector<32x32xbf16>
    %c0_18 = arith.constant 0 : index
    %c0_19 = arith.constant 0 : index
    %19 = vector.load %arg8[%c0_18, %c0_19] : memref<1x32xf32, #tpu.memory_space<vmem>>, vector<1x32xf32>
    %cst_20 = arith.constant dense<0.000000e+00> : vector<128x32xf32>
    %20 = tpu.matmul %1, %16, %cst_20 {dimension_numbers = #tpu.dot_dimension_numbers<[1], [0], [0], [1], [0, 0, 1, 1], [], []>} : vector<128x128xbf16>, vector<128x32xbf16>, vector<128x32xf32> -> vector<128x32xf32>
    %21 = arith.truncf %20 : vector<128x32xf32> to vector<128x32xbf16>
    %cst_21 = arith.constant dense<0.000000e+00> : vector<128x32xf32>
    %22 = tpu.matmul %21, %17, %cst_21 {dimension_numbers = #tpu.dot_dimension_numbers<[1], [0], [0], [1], [0, 0, 1, 1], [], []>} : vector<128x32xbf16>, vector<32x32xbf16>, vector<128x32xf32> -> vector<128x32xf32>
    %cst_22 = arith.constant dense<0.000000e+00> : vector<128x32xf32>
    %23 = tpu.matmul %16, %18, %cst_22 {dimension_numbers = #tpu.dot_dimension_numbers<[1], [0], [0], [1], [0, 0, 1, 1], [], []>} : vector<128x32xbf16>, vector<32x32xbf16>, vector<128x32xf32> -> vector<128x32xf32>
    %24 = arith.addf %22, %23 : vector<128x32xf32>
    %25 = vector.broadcast %19 : vector<1x32xf32> to vector<128x32xf32>
    %26 = arith.addf %24, %25 : vector<128x32xf32>
    %27 = arith.truncf %26 : vector<128x32xf32> to vector<128x32xbf16>
    %cst_23 = arith.constant 0.000000e+00 : bf16
    %28 = vector.broadcast %cst_23 : bf16 to vector<128x32xbf16>
    %29 = arith.maximumf %27, %28 : vector<128x32xbf16>
    %c0_24 = arith.constant 0 : index
    %c0_25 = arith.constant 0 : index
    %30 = vector.load %arg9[%c0_24, %c0_25] : memref<32x16xbf16, #tpu.memory_space<vmem>>, vector<32x16xbf16>
    %c0_26 = arith.constant 0 : index
    %c0_27 = arith.constant 0 : index
    %31 = vector.load %arg10[%c0_26, %c0_27] : memref<32x16xbf16, #tpu.memory_space<vmem>>, vector<32x16xbf16>
    %c0_28 = arith.constant 0 : index
    %c0_29 = arith.constant 0 : index
    %32 = vector.load %arg11[%c0_28, %c0_29] : memref<1x16xf32, #tpu.memory_space<vmem>>, vector<1x16xf32>
    %cst_30 = arith.constant dense<0.000000e+00> : vector<128x16xf32>
    %33 = tpu.matmul %29, %30, %cst_30 {dimension_numbers = #tpu.dot_dimension_numbers<[1], [0], [0], [1], [0, 0, 1, 1], [], []>} : vector<128x32xbf16>, vector<32x16xbf16>, vector<128x16xf32> -> vector<128x16xf32>
    %34 = arith.truncf %33 : vector<128x16xf32> to vector<128x16xbf16>
    %cst_31 = arith.constant dense<0.000000e+00> : vector<128x16xf32>
    %35 = tpu.matmul %29, %31, %cst_31 {dimension_numbers = #tpu.dot_dimension_numbers<[1], [0], [0], [1], [0, 0, 1, 1], [], []>} : vector<128x32xbf16>, vector<32x16xbf16>, vector<128x16xf32> -> vector<128x16xf32>
    %cst_32 = arith.constant dense<0.000000e+00> : vector<128x16xf32>
    %36 = tpu.matmul %1, %34, %cst_32 {dimension_numbers = #tpu.dot_dimension_numbers<[1], [0], [0], [1], [0, 0, 1, 1], [], []>} : vector<128x128xbf16>, vector<128x16xbf16>, vector<128x16xf32> -> vector<128x16xf32>
    %37 = arith.addf %36, %35 : vector<128x16xf32>
    %38 = vector.broadcast %32 : vector<1x16xf32> to vector<128x16xf32>
    %39 = arith.addf %37, %38 : vector<128x16xf32>
    %40 = arith.truncf %39 : vector<128x16xf32> to vector<128x16xbf16>
    %cst_33 = arith.constant 0.000000e+00 : bf16
    %41 = vector.broadcast %cst_33 : bf16 to vector<128x16xbf16>
    %42 = arith.maximumf %40, %41 : vector<128x16xbf16>
    %c0_34 = arith.constant 0 : index
    %c0_35 = arith.constant 0 : index
    %43 = vector.load %arg12[%c0_34, %c0_35] : memref<16x16xbf16, #tpu.memory_space<vmem>>, vector<16x16xbf16>
    %c0_36 = arith.constant 0 : index
    %c0_37 = arith.constant 0 : index
    %44 = vector.load %arg13[%c0_36, %c0_37] : memref<16x16xbf16, #tpu.memory_space<vmem>>, vector<16x16xbf16>
    %c0_38 = arith.constant 0 : index
    %c0_39 = arith.constant 0 : index
    %45 = vector.load %arg14[%c0_38, %c0_39] : memref<1x16xf32, #tpu.memory_space<vmem>>, vector<1x16xf32>
    %cst_40 = arith.constant dense<0.000000e+00> : vector<128x16xf32>
    %46 = tpu.matmul %1, %42, %cst_40 {dimension_numbers = #tpu.dot_dimension_numbers<[1], [0], [0], [1], [0, 0, 1, 1], [], []>} : vector<128x128xbf16>, vector<128x16xbf16>, vector<128x16xf32> -> vector<128x16xf32>
    %47 = arith.truncf %46 : vector<128x16xf32> to vector<128x16xbf16>
    %cst_41 = arith.constant dense<0.000000e+00> : vector<128x16xf32>
    %48 = tpu.matmul %47, %43, %cst_41 {dimension_numbers = #tpu.dot_dimension_numbers<[1], [0], [0], [1], [0, 0, 1, 1], [], []>} : vector<128x16xbf16>, vector<16x16xbf16>, vector<128x16xf32> -> vector<128x16xf32>
    %cst_42 = arith.constant dense<0.000000e+00> : vector<128x16xf32>
    %49 = tpu.matmul %42, %44, %cst_42 {dimension_numbers = #tpu.dot_dimension_numbers<[1], [0], [0], [1], [0, 0, 1, 1], [], []>} : vector<128x16xbf16>, vector<16x16xbf16>, vector<128x16xf32> -> vector<128x16xf32>
    %50 = arith.addf %48, %49 : vector<128x16xf32>
    %51 = vector.broadcast %45 : vector<1x16xf32> to vector<128x16xf32>
    %52 = arith.addf %50, %51 : vector<128x16xf32>
    %53 = arith.truncf %52 : vector<128x16xf32> to vector<128x16xbf16>
    %c0_43 = arith.constant 0 : index
    %c0_44 = arith.constant 0 : index
    %54 = vector.load %arg15[%c0_43, %c0_44] : memref<16x128xbf16, #tpu.memory_space<vmem>>, vector<16x128xbf16>
    %cst_45 = arith.constant dense<0.000000e+00> : vector<128x128xf32>
    %55 = tpu.matmul %53, %54, %cst_45 {dimension_numbers = #tpu.dot_dimension_numbers<[1], [0], [0], [1], [0, 0, 1, 1], [], []>} : vector<128x16xbf16>, vector<16x128xbf16>, vector<128x128xf32> -> vector<128x128xf32>
    %c0_46 = arith.constant 0 : index
    %c0_47 = arith.constant 0 : index
    %56 = vector.load %arg16[%c0_46, %c0_47] : memref<1x128xf32, #tpu.memory_space<vmem>>, vector<1x128xf32>
    %57 = vector.broadcast %56 : vector<1x128xf32> to vector<128x128xf32>
    %58 = arith.addf %55, %57 : vector<128x128xf32>
    %59 = arith.truncf %58 : vector<128x128xf32> to vector<128x128xbf16>
    %c0_48 = arith.constant 0 : index
    %c0_49 = arith.constant 0 : index
    %c0_50 = arith.constant 0 : index
    %60 = vector.load %arg17[%c0_48, %c0_49, %c0_50] : memref<1x128x128xbf16, #tpu.memory_space<vmem>>, vector<1x128x128xbf16>
    %61 = vector.shape_cast %60 : vector<1x128x128xbf16> to vector<128x128xbf16>
    %62 = vector.shape_cast %59 : vector<128x128xbf16> to vector<1x128x128xbf16>
    tpu.vector_store %arg17[%c0_48, %c0_49, %c0_50], %62 {strides = array<i32>} : memref<1x128x128xbf16, #tpu.memory_space<vmem>>, vector<1x128x128xbf16>,
    return
  }
  func.func @transform_0(%arg0: i32) -> (i32, i32, i32) {
    %c0_i32 = arith.constant 0 : i32
    %c0_i32_0 = arith.constant 0 : i32
    %c0_i32_1 = arith.constant 0 : i32
    return %arg0, %c0_i32, %c0_i32_0 : i32, i32, i32
  }
  func.func @transform_1(%arg0: i32) -> (i32, i32, i32) {
    %c0_i32 = arith.constant 0 : i32
    %c0_i32_0 = arith.constant 0 : i32
    %c0_i32_1 = arith.constant 0 : i32
    return %arg0, %c0_i32, %c0_i32_0 : i32, i32, i32
  }
  func.func @transform_2(%arg0: i32) -> (i32, i32) {
    %c0_i32 = arith.constant 0 : i32
    %c0_i32_0 = arith.constant 0 : i32
    %c0_i32_1 = arith.constant 0 : i32
    return %c0_i32, %c0_i32_0 : i32, i32
  }
  func.func @transform_3(%arg0: i32) -> (i32, i32) {
    %c0_i32 = arith.constant 0 : i32
    %c0_i32_0 = arith.constant 0 : i32
    %c0_i32_1 = arith.constant 0 : i32
    return %c0_i32, %c0_i32_0 : i32, i32
  }
  func.func @transform_4(%arg0: i32) -> (i32, i32) {
    %c0_i32 = arith.constant 0 : i32
    %c0_i32_0 = arith.constant 0 : i32
    %c0_i32_1 = arith.constant 0 : i32
    return %c0_i32, %c0_i32_0 : i32, i32
  }
  func.func @transform_5(%arg0: i32) -> (i32, i32) {
    %c0_i32 = arith.constant 0 : i32
    %c0_i32_0 = arith.constant 0 : i32
    %c0_i32_1 = arith.constant 0 : i32
    return %c0_i32, %c0_i32_0 : i32, i32
  }
  func.func @transform_6(%arg0: i32) -> (i32, i32) {
    %c0_i32 = arith.constant 0 : i32
    %c0_i32_0 = arith.constant 0 : i32
    %c0_i32_1 = arith.constant 0 : i32
    return %c0_i32, %c0_i32_0 : i32, i32
  }
  func.func @transform_7(%arg0: i32) -> (i32, i32) {
    %c0_i32 = arith.constant 0 : i32
    %c0_i32_0 = arith.constant 0 : i32
    %c0_i32_1 = arith.constant 0 : i32
    return %c0_i32, %c0_i32_0 : i32, i32
  }
  func.func @transform_8(%arg0: i32) -> (i32, i32) {
    %c0_i32 = arith.constant 0 : i32
    %c0_i32_0 = arith.constant 0 : i32
    %c0_i32_1 = arith.constant 0 : i32
    return %c0_i32, %c0_i32_0 : i32, i32
  }
  func.func @transform_9(%arg0: i32) -> (i32, i32) {
    %c0_i32 = arith.constant 0 : i32
    %c0_i32_0 = arith.constant 0 : i32
    %c0_i32_1 = arith.constant 0 : i32
    return %c0_i32, %c0_i32_0 : i32, i32
  }
  func.func @transform_10(%arg0: i32) -> (i32, i32) {
    %c0_i32 = arith.constant 0 : i32
    %c0_i32_0 = arith.constant 0 : i32
    %c0_i32_1 = arith.constant 0 : i32
    return %c0_i32, %c0_i32_0 : i32, i32
  }
  func.func @transform_11(%arg0: i32) -> (i32, i32) {
    %c0_i32 = arith.constant 0 : i32
    %c0_i32_0 = arith.constant 0 : i32
    %c0_i32_1 = arith.constant 0 : i32
    return %c0_i32, %c0_i32_0 : i32, i32
  }
  func.func @transform_12(%arg0: i32) -> (i32, i32) {
    %c0_i32 = arith.constant 0 : i32
    %c0_i32_0 = arith.constant 0 : i32
    %c0_i32_1 = arith.constant 0 : i32
    return %c0_i32, %c0_i32_0 : i32, i32
  }
  func.func @transform_13(%arg0: i32) -> (i32, i32) {
    %c0_i32 = arith.constant 0 : i32
    %c0_i32_0 = arith.constant 0 : i32
    %c0_i32_1 = arith.constant 0 : i32
    return %c0_i32, %c0_i32_0 : i32, i32
  }
  func.func @transform_14(%arg0: i32) -> (i32, i32) {
    %c0_i32 = arith.constant 0 : i32
    %c0_i32_0 = arith.constant 0 : i32
    %c0_i32_1 = arith.constant 0 : i32
    return %c0_i32, %c0_i32_0 : i32, i32
  }
  func.func @transform_15(%arg0: i32) -> (i32, i32) {
    %c0_i32 = arith.constant 0 : i32
    %c0_i32_0 = arith.constant 0 : i32
    %c0_i32_1 = arith.constant 0 : i32
    return %c0_i32, %c0_i32_0 : i32, i32
  }
  func.func @transform_16(%arg0: i32) -> (i32, i32, i32) {
    %c0_i32 = arith.constant 0 : i32
    %c0_i32_0 = arith.constant 0 : i32
    %c0_i32_1 = arith.constant 0 : i32
    return %arg0, %c0_i32, %c0_i32_0 : i32, i32, i32
  }
}

</mosaic_0001>

<llo_original>
// kernel: tpu_custom_call.1
$region0: #{tpu_custom_call.1}
  #allocation0 [shape = 'u32[]', space=smem, size = 0x4, offset = 0x4, fixed_abs, tag = 'smem constant byte address 0x4 - core index']
  #allocation1 [shape = 'u32[72,128]{1,0:T(1,128)}', space=vmem, size = 0x9000, scoped, tag = 'internal scratch']
  %s0 = inlined_call_operand.vmem [shape: bf16[1,128,128], index: 0, kind: input, shape index: {}]
  %s1 = inlined_call_operand.vmem [shape: bf16[1,128,8], index: 1, kind: input, shape index: {}]
  %s2 = inlined_call_operand.hbm [shape: bf16[8,32], index: 2, kind: input, shape index: {}]
  %s3 = inlined_call_operand.hbm [shape: bf16[8,32], index: 3, kind: input, shape index: {}]
  %s4 = inlined_call_operand.vmem [shape: f32[1,32], index: 4, kind: input, shape index: {}]
  %s5 = inlined_call_operand.vmem [shape: bf16[32,32], index: 5, kind: input, shape index: {}]
  %s6 = inlined_call_operand.vmem [shape: bf16[32,32], index: 6, kind: input, shape index: {}]
  %s7 = inlined_call_operand.hbm [shape: f32[1,32], index: 7, kind: input, shape index: {}]
  %s8 = inlined_call_operand.vmem [shape: bf16[32,16], index: 8, kind: input, shape index: {}]
  %s9 = inlined_call_operand.vmem [shape: bf16[32,16], index: 9, kind: input, shape index: {}]
  %s10 = inlined_call_operand.hbm [shape: f32[1,16], index: 10, kind: input, shape index: {}]
  %s11 = inlined_call_operand.vmem [shape: bf16[16,16], index: 11, kind: input, shape index: {}]
  %s12 = inlined_call_operand.vmem [shape: bf16[16,16], index: 12, kind: input, shape index: {}]
  %s13 = inlined_call_operand.vmem [shape: f32[1,16], index: 13, kind: input, shape index: {}]
  %s14 = inlined_call_operand.hbm [shape: bf16[16,128], index: 14, kind: input, shape index: {}]
  %s15 = inlined_call_operand.vmem [shape: f32[1,128], index: 15, kind: input, shape index: {}]
  %s16 = inlined_call_operand.hbm [shape: bf16[1,128,128], index: 16, kind: output, shape index: {}]
  %s17 = sld [smem:[#allocation0]]
  $region94: #{tpu_custom_call.1} parent=0
    _
  %s19 = ssub.s32 1, %s17
  %s20 = scalar_select 0, %s19, %s17
  $region1: #{tpu_custom_call.1} parent=0
    #allocation2 [shape = 'u8[2048]{0}', space=vmem, size = 0x800, scoped, tag = 'input window, operand 2, single buffered']
    #allocation3 [shape = 's32[1]{0}', space=sflag, size = 0x4, scoped, tag = 'scoped memory for tpu_custom_call.1']
    #allocation4 [shape = 's32[1]{0}', space=sflag, size = 0x4, scoped, tag = 'scoped memory for tpu_custom_call.1']
    #allocation5 [shape = 'u8[2048]{0}', space=vmem, size = 0x800, scoped, tag = 'input window, operand 3, single buffered']
    #allocation6 [shape = 's32[1]{0}', space=sflag, size = 0x4, scoped, tag = 'scoped memory for tpu_custom_call.1']
    #allocation7 [shape = 'u8[512]{0}', space=vmem, size = 0x400, scoped, tag = 'input window, operand 7, single buffered']
    #allocation8 [shape = 'u8[512]{0}', space=vmem, size = 0x400, scoped, tag = 'input window, operand 10, single buffered']
    #allocation9 [shape = 's32[1]{0}', space=sflag, size = 0x4, scoped, tag = 'scoped memory for tpu_custom_call.1']
    #allocation10 [shape = 'u8[4096]{0}', space=vmem, size = 0x1000, scoped, tag = 'input window, operand 14, single buffered']
    #allocation11 [shape = 'u8[32768]{0}', space=vmem, size = 0x8000, scoped, tag = 'output window, operand 0, single buffered']
    %21 = vsyncpa [#allocation3], 0
    %22 = vsyncpa [#allocation6], 0
    %23 = vsyncpa [#allocation9], 0
    %24 = vsyncpa [#allocation4], 0
    // Predicated region
    $region2: #{tpu_custom_call.1} parent=1 // pred_check
      _
    $region3: #{tpu_custom_call.1} parent=1 // pred_check_branch
      %26 = sbr.rel (0) target = $region5
    $region4: #{tpu_custom_call.1} parent=1 // pred_region
      _
    $region5: #{tpu_custom_call.1} parent=1 // pred_fallthru
      _
    // Predicated region
    $region6: #{tpu_custom_call.1} parent=1 // pred_check
      _
    $region7: #{tpu_custom_call.1} parent=1 // pred_check_branch
      %28 = sbr.rel (0) target = $region9
    $region8: #{tpu_custom_call.1} parent=1 // pred_region
      _
    $region9: #{tpu_custom_call.1} parent=1 // pred_fallthru
      _
    // Predicated region
    $region10: #{tpu_custom_call.1} parent=1 // pred_check
      _
    $region11: #{tpu_custom_call.1} parent=1 // pred_check_branch
      %30 = sbr.rel (0) target = $region13
    $region12: #{tpu_custom_call.1} parent=1 // pred_region
      %32 = vsyncadd [#allocation3], 0
      %s34 = sshll.u32 %s2, 4
      %s35 = int_to_ptr.hbm [resolvable:$true] %s34
      %s36 = sshll.u32 [#allocation2], 4
      %s37 = int_to_ptr.vmem [resolvable:$true] %s36
      %39 = dma.hbm_to_vmem [thread:$0]  %s35, 64, %s37, [#allocation3]
    $region13: #{tpu_custom_call.1} parent=1 // pred_fallthru
      _
    // Predicated region
    $region14: #{tpu_custom_call.1} parent=1 // pred_check
      _
    $region15: #{tpu_custom_call.1} parent=1 // pred_check_branch
      %41 = sbr.rel (0) target = $region17
    $region16: #{tpu_custom_call.1} parent=1 // pred_region
      %43 = vsyncadd [#allocation6], 0
      %s45 = sshll.u32 %s3, 4
      %s46 = int_to_ptr.hbm [resolvable:$true] %s45
      %s47 = sshll.u32 [#allocation5], 4
      %s48 = int_to_ptr.vmem [resolvable:$true] %s47
      %50 = dma.hbm_to_vmem [thread:$0]  %s46, 64, %s48, [#allocation6]
    $region17: #{tpu_custom_call.1} parent=1 // pred_fallthru
      _
    // Predicated region
    $region18: #{tpu_custom_call.1} parent=1 // pred_check
      _
    $region19: #{tpu_custom_call.1} parent=1 // pred_check_branch
      %52 = sbr.rel (0) target = $region21
    $region20: #{tpu_custom_call.1} parent=1 // pred_region
      _
    $region21: #{tpu_custom_call.1} parent=1 // pred_fallthru
      _
    // Predicated region
    $region22: #{tpu_custom_call.1} parent=1 // pred_check
      _
    $region23: #{tpu_custom_call.1} parent=1 // pred_check_branch
      %54 = sbr.rel (0) target = $region25
    $region24: #{tpu_custom_call.1} parent=1 // pred_region
      _
    $region25: #{tpu_custom_call.1} parent=1 // pred_fallthru
      _
    // Predicated region
    $region26: #{tpu_custom_call.1} parent=1 // pred_check
      _
    $region27: #{tpu_custom_call.1} parent=1 // pred_check_branch
      %56 = sbr.rel (0) target = $region29
    $region28: #{tpu_custom_call.1} parent=1 // pred_region
      _
    $region29: #{tpu_custom_call.1} parent=1 // pred_fallthru
      _
    // Predicated region
    $region30: #{tpu_custom_call.1} parent=1 // pred_check
      _
    $region31: #{tpu_custom_call.1} parent=1 // pred_check_branch
      %58 = sbr.rel (0) target = $region33
    $region32: #{tpu_custom_call.1} parent=1 // pred_region
      %60 = vsyncadd [#allocation6], 0
      %s62 = sshll.u32 %s7, 4
      %s63 = int_to_ptr.hbm [resolvable:$true] %s62
      %s64 = sshll.u32 [#allocation7], 4
      %s65 = int_to_ptr.vmem [resolvable:$true] %s64
      %67 = dma.hbm_to_vmem [thread:$0]  %s63, 16, %s65, [#allocation6]
    $region33: #{tpu_custom_call.1} parent=1 // pred_fallthru
      _
    // Predicated region
    $region34: #{tpu_custom_call.1} parent=1 // pred_check
      _
    $region35: #{tpu_custom_call.1} parent=1 // pred_check_branch
      %69 = sbr.rel (0) target = $region37
    $region36: #{tpu_custom_call.1} parent=1 // pred_region
      _
    $region37: #{tpu_custom_call.1} parent=1 // pred_fallthru
      _
    // Predicated region
    $region38: #{tpu_custom_call.1} parent=1 // pred_check
      _
    $region39: #{tpu_custom_call.1} parent=1 // pred_check_branch
      %71 = sbr.rel (0) target = $region41
    $region40: #{tpu_custom_call.1} parent=1 // pred_region
      _
    $region41: #{tpu_custom_call.1} parent=1 // pred_fallthru
      _
    // Predicated region
    $region42: #{tpu_custom_call.1} parent=1 // pred_check
      _
    $region43: #{tpu_custom_call.1} parent=1 // pred_check_branch
      %73 = sbr.rel (0) target = $region45
    $region44: #{tpu_custom_call.1} parent=1 // pred_region
      %75 = vsyncadd [#allocation9], 0
      %s77 = sshll.u32 %s10, 4
      %s78 = int_to_ptr.hbm [resolvable:$true] %s77
      %s79 = sshll.u32 [#allocation8], 4
      %s80 = int_to_ptr.vmem [resolvable:$true] %s79
      %82 = dma.hbm_to_vmem [thread:$0]  %s78, 16, %s80, [#allocation9]
    $region45: #{tpu_custom_call.1} parent=1 // pred_fallthru
      _
    // Predicated region
    $region46: #{tpu_custom_call.1} parent=1 // pred_check
      _
    $region47: #{tpu_custom_call.1} parent=1 // pred_check_branch
      %84 = sbr.rel (0) target = $region49
    $region48: #{tpu_custom_call.1} parent=1 // pred_region
      _
    $region49: #{tpu_custom_call.1} parent=1 // pred_fallthru
      _
    // Predicated region
    $region50: #{tpu_custom_call.1} parent=1 // pred_check
      _
    $region51: #{tpu_custom_call.1} parent=1 // pred_check_branch
      %86 = sbr.rel (0) target = $region53
    $region52: #{tpu_custom_call.1} parent=1 // pred_region
      _
    $region53: #{tpu_custom_call.1} parent=1 // pred_fallthru
      _
    // Predicated region
    $region54: #{tpu_custom_call.1} parent=1 // pred_check
      _
    $region55: #{tpu_custom_call.1} parent=1 // pred_check_branch
      %88 = sbr.rel (0) target = $region57
    $region56: #{tpu_custom_call.1} parent=1 // pred_region
      _
    $region57: #{tpu_custom_call.1} parent=1 // pred_fallthru
      _
    // Predicated region
    $region58: #{tpu_custom_call.1} parent=1 // pred_check
      _
    $region59: #{tpu_custom_call.1} parent=1 // pred_check_branch
      %90 = sbr.rel (0) target = $region61
    $region60: #{tpu_custom_call.1} parent=1 // pred_region
      %92 = vsyncadd [#allocation9], 0
      %s93 = sshll.u32 %s14, 4
      %s94 = int_to_ptr.hbm [resolvable:$true] %s93
      %s95 = sshll.u32 [#allocation10], 4
      %s96 = int_to_ptr.vmem [resolvable:$true] %s95
      %101 = dma.hbm_to_vmem [thread:$0]  %s94, 128, %s96, [#allocation9], 64, 64, 4
    $region61: #{tpu_custom_call.1} parent=1 // pred_fallthru
      _
    // Predicated region
    $region62: #{tpu_custom_call.1} parent=1 // pred_check
      _
    $region63: #{tpu_custom_call.1} parent=1 // pred_check_branch
      %103 = sbr.rel (0) target = $region65
    $region64: #{tpu_custom_call.1} parent=1 // pred_region
      _
    $region65: #{tpu_custom_call.1} parent=1 // pred_fallthru
      _
    // Predicated region
    $region66: #{tpu_custom_call.1} parent=1 // pred_check
      _
    $region67: #{tpu_custom_call.1} parent=1 // pred_check_branch
      %105 = sbr.rel (0) target = $region69
    $region68: #{tpu_custom_call.1} parent=1 // pred_region
      %107 = dma.done [#allocation3], 64
    $region69: #{tpu_custom_call.1} parent=1 // pred_fallthru
      _
    // Predicated region
    $region70: #{tpu_custom_call.1} parent=1 // pred_check
      _
    $region71: #{tpu_custom_call.1} parent=1 // pred_check_branch
      %109 = sbr.rel (0) target = $region73
    $region72: #{tpu_custom_call.1} parent=1 // pred_region
      %111 = dma.done [#allocation6], 64
    $region73: #{tpu_custom_call.1} parent=1 // pred_fallthru
      _
    // Predicated region
    $region74: #{tpu_custom_call.1} parent=1 // pred_check
      _
    $region75: #{tpu_custom_call.1} parent=1 // pred_check_branch
      %113 = sbr.rel (0) target = $region77
    $region76: #{tpu_custom_call.1} parent=1 // pred_region
      %115 = dma.done [#allocation6], 16
    $region77: #{tpu_custom_call.1} parent=1 // pred_fallthru
      _
    // Predicated region
    $region78: #{tpu_custom_call.1} parent=1 // pred_check
      _
    $region79: #{tpu_custom_call.1} parent=1 // pred_check_branch
      %117 = sbr.rel (0) target = $region81
    $region80: #{tpu_custom_call.1} parent=1 // pred_region
      %119 = dma.done [#allocation9], 16
    $region81: #{tpu_custom_call.1} parent=1 // pred_fallthru
      _
    // Predicated region
    $region82: #{tpu_custom_call.1} parent=1 // pred_check
      _
    $region83: #{tpu_custom_call.1} parent=1 // pred_check_branch
      %121 = sbr.rel (0) target = $region85
    $region84: #{tpu_custom_call.1} parent=1 // pred_region
      %123 = dma.done [#allocation9], 128
    $region85: #{tpu_custom_call.1} parent=1 // pred_fallthru
      _
    %v125 = vld [vmem:[%s0] sm:$0xf]
    %v126 = vld [vmem:[%s0 + $0x4] sm:$0xf]
    %v127 = vld [vmem:[%s0 + $0x8] sm:$0xf]
    %v128 = vld [vmem:[%s0 + $0xc] sm:$0xf]
    %v129 = vld [vmem:[%s0 + $0x10] sm:$0xf]
    %v130 = vld [vmem:[%s0 + $0x14] sm:$0xf]
    %v131 = vld [vmem:[%s0 + $0x18] sm:$0xf]
    %v132 = vld [vmem:[%s0 + $0x1c] sm:$0xf]
    %v133 = vld [vmem:[%s0 + $0x20] sm:$0xf]
    %v134 = vld [vmem:[%s0 + $0x24] sm:$0xf]
    %v135 = vld [vmem:[%s0 + $0x28] sm:$0xf]
    %v136 = vld [vmem:[%s0 + $0x2c] sm:$0xf]
    %v137 = vld [vmem:[%s0 + $0x30] sm:$0xf]
    %v138 = vld [vmem:[%s0 + $0x34] sm:$0xf]
    %v139 = vld [vmem:[%s0 + $0x38] sm:$0xf]
    %v140 = vld [vmem:[%s0 + $0x3c] sm:$0xf]
    %v141 = vld [vmem:[%s1] sm:$0xf]
    %v142 = vld [vmem:[%s1 + $0x4] sm:$0xf]
    %v143 = vld [vmem:[%s1 + $0x8] sm:$0xf]
    %v144 = vld [vmem:[%s1 + $0xc] sm:$0xf]
    %v145 = vld [vmem:[%s1 + $0x10] sm:$0xf]
    %v146 = vld [vmem:[%s1 + $0x14] sm:$0xf]
    %v147 = vld [vmem:[%s1 + $0x18] sm:$0xf]
    %v148 = vld [vmem:[%s1 + $0x1c] sm:$0xf]
    %v149 = vld [vmem:[%s1 + $0x20] sm:$0xf]
    %v150 = vld [vmem:[%s1 + $0x24] sm:$0xf]
    %v151 = vld [vmem:[%s1 + $0x28] sm:$0xf]
    %v152 = vld [vmem:[%s1 + $0x2c] sm:$0xf]
    %v153 = vld [vmem:[%s1 + $0x30] sm:$0xf]
    %v154 = vld [vmem:[%s1 + $0x34] sm:$0xf]
    %v155 = vld [vmem:[%s1 + $0x38] sm:$0xf]
    %v156 = vld [vmem:[%s1 + $0x3c] sm:$0xf]
    %v157 = vld [vmem:[#allocation2] sm:$0xf]
    %v158 = vld [vmem:[#allocation5] sm:$0xf]
    %v159 = vld [vmem:[%s4] sm:$0x1]
    %v176 = vunpack.c.l.b16 %v125
    %v177 = vunpack.c.l.b16 %v126
    %v178 = vunpack.c.l.b16 %v127
    %v179 = vunpack.c.l.b16 %v128
    %v180 = vunpack.c.l.b16 %v129
    %v181 = vunpack.c.l.b16 %v130
    %v182 = vunpack.c.l.b16 %v131
    %v183 = vunpack.c.l.b16 %v132
    %v184 = vunpack.c.l.b16 %v133
    %v185 = vunpack.c.l.b16 %v134
    %v186 = vunpack.c.l.b16 %v135
    %v187 = vunpack.c.l.b16 %v136
    %v188 = vunpack.c.l.b16 %v137
    %v189 = vunpack.c.l.b16 %v138
    %v190 = vunpack.c.l.b16 %v139
    %v191 = vunpack.c.l.b16 %v140
    %v192 = vpack.c.b16 %v177, %v176
    %v193 = vpack.c.b16 %v179, %v178
    %v194 = vpack.c.b16 %v181, %v180
    %v195 = vpack.c.b16 %v183, %v182
    %v196 = vpack.c.b16 %v185, %v184
    %v197 = vpack.c.b16 %v187, %v186
    %v198 = vpack.c.b16 %v189, %v188
    %v199 = vpack.c.b16 %v191, %v190
    %v224 = vunpack.c.l.b16 %v141
    %v225 = vunpack.c.l.b16 %v142
    %v226 = vunpack.c.l.b16 %v143
    %v227 = vunpack.c.l.b16 %v144
    %v228 = vunpack.c.l.b16 %v145
    %v229 = vunpack.c.l.b16 %v146
    %v230 = vunpack.c.l.b16 %v147
    %v231 = vunpack.c.l.b16 %v148
    %v232 = vunpack.c.l.b16 %v149
    %v233 = vunpack.c.l.b16 %v150
    %v234 = vunpack.c.l.b16 %v151
    %v235 = vunpack.c.l.b16 %v152
    %v236 = vunpack.c.l.b16 %v153
    %v237 = vunpack.c.l.b16 %v154
    %v238 = vunpack.c.l.b16 %v155
    %v239 = vunpack.c.l.b16 %v156
    %v240 = vpack.c.b16 %v225, %v224
    %v241 = vpack.c.b16 %v227, %v226
    %v242 = vpack.c.b16 %v229, %v228
    %v243 = vpack.c.b16 %v231, %v230
    %v244 = vpack.c.b16 %v233, %v232
    %v245 = vpack.c.b16 %v235, %v234
    %v246 = vpack.c.b16 %v237, %v236
    %v247 = vpack.c.b16 %v239, %v238
    %256 = vmatpush.bf16.msra.mxu0 %v247
    %257 = vmatpush.bf16.msra.mxu0 %v246
    %258 = vmatpush.bf16.msra.mxu0 %v245
    %259 = vmatpush.bf16.msra.mxu0 %v244
    %260 = vmatpush.bf16.msra.mxu0 %v243
    %261 = vmatpush.bf16.msra.mxu0 %v242
    %262 = vmatpush.bf16.msra.mxu0 %v241
    %263 = vmatpush.bf16.msra.mxu0 %v240
    %264 = vmatmul.bf16.gmra.mxu0 %v192
    %v265 = vpop.f32.mrf.mxu0
    %v266 = vadd.f32 0.0, %v265
    %v267 = vpop.f32.mrf.mxu0
    %v268 = vadd.f32 0.0, %v267
    %269 = vmatmul.bf16.gmra.mxu0 %v193
    %v270 = vpop.f32.mrf.mxu0
    %v271 = vadd.f32 0.0, %v270
    %v272 = vpop.f32.mrf.mxu0
    %v273 = vadd.f32 0.0, %v272
    %274 = vmatmul.bf16.gmra.mxu0 %v194
    %v275 = vpop.f32.mrf.mxu0
    %v276 = vadd.f32 0.0, %v275
    %v277 = vpop.f32.mrf.mxu0
    %v278 = vadd.f32 0.0, %v277
    %279 = vmatmul.bf16.gmra.mxu0 %v195
    %v280 = vpop.f32.mrf.mxu0
    %v281 = vadd.f32 0.0, %v280
    %v282 = vpop.f32.mrf.mxu0
    %v283 = vadd.f32 0.0, %v282
    %284 = vmatmul.bf16.gmra.mxu0 %v196
    %v285 = vpop.f32.mrf.mxu0
    %v286 = vadd.f32 0.0, %v285
    %v287 = vpop.f32.mrf.mxu0
    %v288 = vadd.f32 0.0, %v287
    %289 = vmatmul.bf16.gmra.mxu0 %v197
    %v290 = vpop.f32.mrf.mxu0
    %v291 = vadd.f32 0.0, %v290
    %v292 = vpop.f32.mrf.mxu0
    %v293 = vadd.f32 0.0, %v292
    %294 = vmatmul.bf16.gmra.mxu0 %v198
    %v295 = vpop.f32.mrf.mxu0
    %v296 = vadd.f32 0.0, %v295
    %v297 = vpop.f32.mrf.mxu0
    %v298 = vadd.f32 0.0, %v297
    %299 = vmatmul.bf16.gmra.mxu0 %v199
    %v300 = vpop.f32.mrf.mxu0
    %v301 = vadd.f32 0.0, %v300
    %v302 = vpop.f32.mrf.mxu0
    %v303 = vadd.f32 0.0, %v302
    %304 = vdwg.mxu0
    %v305 = vpack.c.bf16 %v268, %v266
    %v306 = vpack.c.bf16 %v273, %v271
    %v307 = vpack.c.bf16 %v278, %v276
    %v308 = vpack.c.bf16 %v283, %v281
    %v309 = vpack.c.bf16 %v288, %v286
    %v310 = vpack.c.bf16 %v293, %v291
    %v311 = vpack.c.bf16 %v298, %v296
    %v312 = vpack.c.bf16 %v303, %v301
    %vm313 = vcmask 64512
    %v315 = vsel %vm313, %v240, 0
    %v318 = vsel %vm313, %v241, 0
    %v321 = vsel %vm313, %v242, 0
    %v324 = vsel %vm313, %v243, 0
    %v327 = vsel %vm313, %v244, 0
    %v330 = vsel %vm313, %v245, 0
    %v333 = vsel %vm313, %v246, 0
    %v336 = vsel %vm313, %v247, 0
    %vm338 = vcmask 1043456
    %v340 = vsel %vm338, %v158, 0
    %342 = vmatpush.bf16.msra.mxu0 0
    %343 = vmatpush.bf16.msra.mxu0 0
    %344 = vmatpush.bf16.msra.mxu0 0
    %345 = vmatpush.bf16.msra.mxu0 0
    %346 = vmatpush.bf16.msra.mxu0 0
    %347 = vmatpush.bf16.msra.mxu0 0
    %348 = vmatpush.bf16.msra.mxu0 0
    %349 = vmatpush.bf16.msra.mxu0 %v340
    %350 = vmatmul.bf16.gmra.mxu0 %v315
    %v351 = vpop.f32.mrf.mxu0
    %v352 = vadd.f32 0.0, %v351
    %v353 = vpop.f32.mrf.mxu0
    %v354 = vadd.f32 0.0, %v353
    %355 = vmatmul.bf16.gmra.mxu0 %v318
    %v356 = vpop.f32.mrf.mxu0
    %v357 = vadd.f32 0.0, %v356
    %v358 = vpop.f32.mrf.mxu0
    %v359 = vadd.f32 0.0, %v358
    %360 = vmatmul.bf16.gmra.mxu0 %v321
    %v361 = vpop.f32.mrf.mxu0
    %v362 = vadd.f32 0.0, %v361
    %v363 = vpop.f32.mrf.mxu0
    %v364 = vadd.f32 0.0, %v363
    %365 = vmatmul.bf16.gmra.mxu0 %v324
    %v366 = vpop.f32.mrf.mxu0
    %v367 = vadd.f32 0.0, %v366
    %v368 = vpop.f32.mrf.mxu0
    %v369 = vadd.f32 0.0, %v368
    %370 = vmatmul.bf16.gmra.mxu0 %v327
    %v371 = vpop.f32.mrf.mxu0
    %v372 = vadd.f32 0.0, %v371
    %v373 = vpop.f32.mrf.mxu0
    %v374 = vadd.f32 0.0, %v373
    %375 = vmatmul.bf16.gmra.mxu0 %v330
    %v376 = vpop.f32.mrf.mxu0
    %v377 = vadd.f32 0.0, %v376
    %v378 = vpop.f32.mrf.mxu0
    %v379 = vadd.f32 0.0, %v378
    %380 = vmatmul.bf16.gmra.mxu0 %v333
    %v381 = vpop.f32.mrf.mxu0
    %v382 = vadd.f32 0.0, %v381
    %v383 = vpop.f32.mrf.mxu0
    %v384 = vadd.f32 0.0, %v383
    %385 = vmatmul.bf16.gmra.mxu0 %v336
    %v386 = vpop.f32.mrf.mxu0
    %v387 = vadd.f32 0.0, %v386
    %v388 = vpop.f32.mrf.mxu0
    %v389 = vadd.f32 0.0, %v388
    %390 = vdwg.mxu0
    %v392 = vsel %vm313, %v305, 0
    %v395 = vsel %vm313, %v306, 0
    %v398 = vsel %vm313, %v307, 0
    %v401 = vsel %vm313, %v308, 0
    %v404 = vsel %vm313, %v309, 0
    %v407 = vsel %vm313, %v310, 0
    %v410 = vsel %vm313, %v311, 0
    %v413 = vsel %vm313, %v312, 0
    %v416 = vsel %vm338, %v157, 0
    %418 = vmatpush.bf16.msra.mxu0 0
    %419 = vmatpush.bf16.msra.mxu0 0
    %420 = vmatpush.bf16.msra.mxu0 0
    %421 = vmatpush.bf16.msra.mxu0 0
    %422 = vmatpush.bf16.msra.mxu0 0
    %423 = vmatpush.bf16.msra.mxu0 0
    %424 = vmatpush.bf16.msra.mxu0 0
    %425 = vmatpush.bf16.msra.mxu0 %v416
    %426 = vmatmul.bf16.gmra.mxu0 %v392
    %v427 = vpop.f32.mrf.mxu0
    %v428 = vadd.f32 %v352, %v427
    %v429 = vpop.f32.mrf.mxu0
    %v430 = vadd.f32 %v354, %v429
    %431 = vmatmul.bf16.gmra.mxu0 %v395
    %v432 = vpop.f32.mrf.mxu0
    %v433 = vadd.f32 %v357, %v432
    %v434 = vpop.f32.mrf.mxu0
    %v435 = vadd.f32 %v359, %v434
    %436 = vmatmul.bf16.gmra.mxu0 %v398
    %v437 = vpop.f32.mrf.mxu0
    %v438 = vadd.f32 %v362, %v437
    %v439 = vpop.f32.mrf.mxu0
    %v440 = vadd.f32 %v364, %v439
    %441 = vmatmul.bf16.gmra.mxu0 %v401
    %v442 = vpop.f32.mrf.mxu0
    %v443 = vadd.f32 %v367, %v442
    %v444 = vpop.f32.mrf.mxu0
    %v445 = vadd.f32 %v369, %v444
    %446 = vmatmul.bf16.gmra.mxu0 %v404
    %v447 = vpop.f32.mrf.mxu0
    %v448 = vadd.f32 %v372, %v447
    %v449 = vpop.f32.mrf.mxu0
    %v450 = vadd.f32 %v374, %v449
    %451 = vmatmul.bf16.gmra.mxu0 %v407
    %v452 = vpop.f32.mrf.mxu0
    %v453 = vadd.f32 %v377, %v452
    %v454 = vpop.f32.mrf.mxu0
    %v455 = vadd.f32 %v379, %v454
    %456 = vmatmul.bf16.gmra.mxu0 %v410
    %v457 = vpop.f32.mrf.mxu0
    %v458 = vadd.f32 %v382, %v457
    %v459 = vpop.f32.mrf.mxu0
    %v460 = vadd.f32 %v384, %v459
    %461 = vmatmul.bf16.gmra.mxu0 %v413
    %v462 = vpop.f32.mrf.mxu0
    %v463 = vadd.f32 %v387, %v462
    %v464 = vpop.f32.mrf.mxu0
    %v465 = vadd.f32 %v389, %v464
    %466 = vdwg.mxu0
    %v468 = vperm.slane %v159, 0
    %v470 = vadd.f32 %v428, %v468
    %v471 = vadd.f32 %v430, %v468
    %v472 = vadd.f32 %v433, %v468
    %v473 = vadd.f32 %v435, %v468
    %v474 = vadd.f32 %v438, %v468
    %v475 = vadd.f32 %v440, %v468
    %v476 = vadd.f32 %v443, %v468
    %v477 = vadd.f32 %v445, %v468
    %v478 = vadd.f32 %v448, %v468
    %v479 = vadd.f32 %v450, %v468
    %v480 = vadd.f32 %v453, %v468
    %v481 = vadd.f32 %v455, %v468
    %v482 = vadd.f32 %v458, %v468
    %v483 = vadd.f32 %v460, %v468
    %v484 = vadd.f32 %v463, %v468
    %v485 = vadd.f32 %v465, %v468
    %v486 = vpack.c.bf16 %v470, %v470
    %v487 = vpack.c.bf16 %v471, %v471
    %v488 = vpack.c.bf16 %v472, %v472
    %v489 = vpack.c.bf16 %v473, %v473
    %v490 = vpack.c.bf16 %v474, %v474
    %v491 = vpack.c.bf16 %v475, %v475
    %v492 = vpack.c.bf16 %v476, %v476
    %v493 = vpack.c.bf16 %v477, %v477
    %v494 = vpack.c.bf16 %v478, %v478
    %v495 = vpack.c.bf16 %v479, %v479
    %v496 = vpack.c.bf16 %v480, %v480
    %v497 = vpack.c.bf16 %v481, %v481
    %v498 = vpack.c.bf16 %v482, %v482
    %v499 = vpack.c.bf16 %v483, %v483
    %v500 = vpack.c.bf16 %v484, %v484
    %v501 = vpack.c.bf16 %v485, %v485
    %v502 = vunpack.c.l.bf16 %v486
    %v503 = vunpack.c.l.bf16 %v487
    %v504 = vunpack.c.l.bf16 %v488
    %v505 = vunpack.c.l.bf16 %v489
    %v506 = vunpack.c.l.bf16 %v490
    %v507 = vunpack.c.l.bf16 %v491
    %v508 = vunpack.c.l.bf16 %v492
    %v509 = vunpack.c.l.bf16 %v493
    %v510 = vunpack.c.l.bf16 %v494
    %v511 = vunpack.c.l.bf16 %v495
    %v512 = vunpack.c.l.bf16 %v496
    %v513 = vunpack.c.l.bf16 %v497
    %v514 = vunpack.c.l.bf16 %v498
    %v515 = vunpack.c.l.bf16 %v499
    %v516 = vunpack.c.l.bf16 %v500
    %v517 = vunpack.c.l.bf16 %v501
    %v518 = vmax.f32 %v502, 0.0
    %v519 = vmax.f32 %v503, 0.0
    %v520 = vmax.f32 %v504, 0.0
    %v521 = vmax.f32 %v505, 0.0
    %v522 = vmax.f32 %v506, 0.0
    %v523 = vmax.f32 %v507, 0.0
    %v524 = vmax.f32 %v508, 0.0
    %v525 = vmax.f32 %v509, 0.0
    %v526 = vmax.f32 %v510, 0.0
    %v527 = vmax.f32 %v511, 0.0
    %v528 = vmax.f32 %v512, 0.0
    %v529 = vmax.f32 %v513, 0.0
    %v530 = vmax.f32 %v514, 0.0
    %v531 = vmax.f32 %v515, 0.0
    %v532 = vmax.f32 %v516, 0.0
    %v533 = vmax.f32 %v517, 0.0
    %v534 = vpack.c.bf16 %v519, %v518
    %v535 = vpack.c.bf16 %v521, %v520
    %v536 = vpack.c.bf16 %v523, %v522
    %v537 = vpack.c.bf16 %v525, %v524
    %v538 = vpack.c.bf16 %v527, %v526
    %v539 = vpack.c.bf16 %v529, %v528
    %v540 = vpack.c.bf16 %v531, %v530
    %v541 = vpack.c.bf16 %v533, %v532
    %v542 = vld [vmem:[%s5] sm:$0xf]
    %v543 = vld [vmem:[%s5 + $0x4] sm:$0xf]
    %v544 = vld [vmem:[%s5 + $0x8] sm:$0xf]
    %v545 = vld [vmem:[%s5 + $0xc] sm:$0xf]
    %v546 = vld [vmem:[%s6] sm:$0xf]
    %v547 = vld [vmem:[%s6 + $0x4] sm:$0xf]
    %v548 = vld [vmem:[%s6 + $0x8] sm:$0xf]
    %v549 = vld [vmem:[%s6 + $0xc] sm:$0xf]
    %v550 = vld [vmem:[#allocation7] sm:$0x1]
    %551 = vmatpush.bf16.msra.mxu0 %v541
    %552 = vmatpush.bf16.msra.mxu0 %v540
    %553 = vmatpush.bf16.msra.mxu0 %v539
    %554 = vmatpush.bf16.msra.mxu0 %v538
    %555 = vmatpush.bf16.msra.mxu0 %v537
    %556 = vmatpush.bf16.msra.mxu0 %v536
    %557 = vmatpush.bf16.msra.mxu0 %v535
    %558 = vmatpush.bf16.msra.mxu0 %v534
    %559 = vmatmul.bf16.gmra.mxu0 %v192
    %v560 = vpop.f32.mrf.mxu0
    %v561 = vadd.f32 0.0, %v560
    %v562 = vpop.f32.mrf.mxu0
    %v563 = vadd.f32 0.0, %v562
    %564 = vmatmul.bf16.gmra.mxu0 %v193
    %v565 = vpop.f32.mrf.mxu0
    %v566 = vadd.f32 0.0, %v565
    %v567 = vpop.f32.mrf.mxu0
    %v568 = vadd.f32 0.0, %v567
    %569 = vmatmul.bf16.gmra.mxu0 %v194
    %v570 = vpop.f32.mrf.mxu0
    %v571 = vadd.f32 0.0, %v570
    %v572 = vpop.f32.mrf.mxu0
    %v573 = vadd.f32 0.0, %v572
    %574 = vmatmul.bf16.gmra.mxu0 %v195
    %v575 = vpop.f32.mrf.mxu0
    %v576 = vadd.f32 0.0, %v575
    %v577 = vpop.f32.mrf.mxu0
    %v578 = vadd.f32 0.0, %v577
    %579 = vmatmul.bf16.gmra.mxu0 %v196
    %v580 = vpop.f32.mrf.mxu0
    %v581 = vadd.f32 0.0, %v580
    %v582 = vpop.f32.mrf.mxu0
    %v583 = vadd.f32 0.0, %v582
    %584 = vmatmul.bf16.gmra.mxu0 %v197
    %v585 = vpop.f32.mrf.mxu0
    %v586 = vadd.f32 0.0, %v585
    %v587 = vpop.f32.mrf.mxu0
    %v588 = vadd.f32 0.0, %v587
    %589 = vmatmul.bf16.gmra.mxu0 %v198
    %v590 = vpop.f32.mrf.mxu0
    %v591 = vadd.f32 0.0, %v590
    %v592 = vpop.f32.mrf.mxu0
    %v593 = vadd.f32 0.0, %v592
    %594 = vmatmul.bf16.gmra.mxu0 %v199
    %v595 = vpop.f32.mrf.mxu0
    %v596 = vadd.f32 0.0, %v595
    %v597 = vpop.f32.mrf.mxu0
    %v598 = vadd.f32 0.0, %v597
    %599 = vdwg.mxu0
    %v600 = vpack.c.bf16 %v563, %v561
    %v601 = vpack.c.bf16 %v568, %v566
    %v602 = vpack.c.bf16 %v573, %v571
    %v603 = vpack.c.bf16 %v578, %v576
    %v604 = vpack.c.bf16 %v583, %v581
    %v605 = vpack.c.bf16 %v588, %v586
    %v606 = vpack.c.bf16 %v593, %v591
    %v607 = vpack.c.bf16 %v598, %v596
    %v612 = vunpack.c.l.b16 %v546
    %v613 = vunpack.c.l.b16 %v547
    %v614 = vunpack.c.l.b16 %v548
    %v615 = vunpack.c.l.b16 %v549
    %v616 = vpack.c.b16 %v613, %v612
    %v617 = vpack.c.b16 %v615, %v614
    %vm620 = vcmask 261120
    %v622 = vsel %vm620, %v534, 0
    %v625 = vsel %vm620, %v535, 0
    %v628 = vsel %vm620, %v536, 0
    %v631 = vsel %vm620, %v537, 0
    %v634 = vsel %vm620, %v538, 0
    %v637 = vsel %vm620, %v539, 0
    %v640 = vsel %vm620, %v540, 0
    %v643 = vsel %vm620, %v541, 0
    %645 = vmatpush.bf16.msra.mxu0 0
    %646 = vmatpush.bf16.msra.mxu0 0
    %647 = vmatpush.bf16.msra.mxu0 0
    %648 = vmatpush.bf16.msra.mxu0 0
    %649 = vmatpush.bf16.msra.mxu0 0
    %650 = vmatpush.bf16.msra.mxu0 0
    %651 = vmatpush.bf16.msra.mxu0 %v617
    %652 = vmatpush.bf16.msra.mxu0 %v616
    %653 = vmatmul.bf16.gmra.mxu0 %v622
    %v654 = vpop.f32.mrf.mxu0
    %v655 = vadd.f32 0.0, %v654
    %v656 = vpop.f32.mrf.mxu0
    %v657 = vadd.f32 0.0, %v656
    %658 = vmatmul.bf16.gmra.mxu0 %v625
    %v659 = vpop.f32.mrf.mxu0
    %v660 = vadd.f32 0.0, %v659
    %v661 = vpop.f32.mrf.mxu0
    %v662 = vadd.f32 0.0, %v661
    %663 = vmatmul.bf16.gmra.mxu0 %v628
    %v664 = vpop.f32.mrf.mxu0
    %v665 = vadd.f32 0.0, %v664
    %v666 = vpop.f32.mrf.mxu0
    %v667 = vadd.f32 0.0, %v666
    %668 = vmatmul.bf16.gmra.mxu0 %v631
    %v669 = vpop.f32.mrf.mxu0
    %v670 = vadd.f32 0.0, %v669
    %v671 = vpop.f32.mrf.mxu0
    %v672 = vadd.f32 0.0, %v671
    %673 = vmatmul.bf16.gmra.mxu0 %v634
    %v674 = vpop.f32.mrf.mxu0
    %v675 = vadd.f32 0.0, %v674
    %v676 = vpop.f32.mrf.mxu0
    %v677 = vadd.f32 0.0, %v676
    %678 = vmatmul.bf16.gmra.mxu0 %v637
    %v679 = vpop.f32.mrf.mxu0
    %v680 = vadd.f32 0.0, %v679
    %v681 = vpop.f32.mrf.mxu0
    %v682 = vadd.f32 0.0, %v681
    %683 = vmatmul.bf16.gmra.mxu0 %v640
    %v684 = vpop.f32.mrf.mxu0
    %v685 = vadd.f32 0.0, %v684
    %v686 = vpop.f32.mrf.mxu0
    %v687 = vadd.f32 0.0, %v686
    %688 = vmatmul.bf16.gmra.mxu0 %v643
    %v689 = vpop.f32.mrf.mxu0
    %v690 = vadd.f32 0.0, %v689
    %v691 = vpop.f32.mrf.mxu0
    %v692 = vadd.f32 0.0, %v691
    %693 = vdwg.mxu0
    %v698 = vunpack.c.l.b16 %v542
    %v699 = vunpack.c.l.b16 %v543
    %v700 = vunpack.c.l.b16 %v544
    %v701 = vunpack.c.l.b16 %v545
    %v702 = vpack.c.b16 %v699, %v698
    %v703 = vpack.c.b16 %v701, %v700
    %v707 = vsel %vm620, %v600, 0
    %v710 = vsel %vm620, %v601, 0
    %v713 = vsel %vm620, %v602, 0
    %v716 = vsel %vm620, %v603, 0
    %v719 = vsel %vm620, %v604, 0
    %v722 = vsel %vm620, %v605, 0
    %v725 = vsel %vm620, %v606, 0
    %v728 = vsel %vm620, %v607, 0
    %730 = vmatpush.bf16.msra.mxu0 0
    %731 = vmatpush.bf16.msra.mxu0 0
    %732 = vmatpush.bf16.msra.mxu0 0
    %733 = vmatpush.bf16.msra.mxu0 0
    %734 = vmatpush.bf16.msra.mxu0 0
    %735 = vmatpush.bf16.msra.mxu0 0
    %736 = vmatpush.bf16.msra.mxu0 %v703
    %737 = vmatpush.bf16.msra.mxu0 %v702
    %738 = vmatmul.bf16.gmra.mxu0 %v707
    %v739 = vpop.f32.mrf.mxu0
    %v740 = vadd.f32 %v655, %v739
    %v741 = vpop.f32.mrf.mxu0
    %v742 = vadd.f32 %v657, %v741
    %743 = vmatmul.bf16.gmra.mxu0 %v710
    %v744 = vpop.f32.mrf.mxu0
    %v745 = vadd.f32 %v660, %v744
    %v746 = vpop.f32.mrf.mxu0
    %v747 = vadd.f32 %v662, %v746
    %748 = vmatmul.bf16.gmra.mxu0 %v713
    %v749 = vpop.f32.mrf.mxu0
    %v750 = vadd.f32 %v665, %v749
    %v751 = vpop.f32.mrf.mxu0
    %v752 = vadd.f32 %v667, %v751
    %753 = vmatmul.bf16.gmra.mxu0 %v716
    %v754 = vpop.f32.mrf.mxu0
    %v755 = vadd.f32 %v670, %v754
    %v756 = vpop.f32.mrf.mxu0
    %v757 = vadd.f32 %v672, %v756
    %758 = vmatmul.bf16.gmra.mxu0 %v719
    %v759 = vpop.f32.mrf.mxu0
    %v760 = vadd.f32 %v675, %v759
    %v761 = vpop.f32.mrf.mxu0
    %v762 = vadd.f32 %v677, %v761
    %763 = vmatmul.bf16.gmra.mxu0 %v722
    %v764 = vpop.f32.mrf.mxu0
    %v765 = vadd.f32 %v680, %v764
    %v766 = vpop.f32.mrf.mxu0
    %v767 = vadd.f32 %v682, %v766
    %768 = vmatmul.bf16.gmra.mxu0 %v725
    %v769 = vpop.f32.mrf.mxu0
    %v770 = vadd.f32 %v685, %v769
    %v771 = vpop.f32.mrf.mxu0
    %v772 = vadd.f32 %v687, %v771
    %773 = vmatmul.bf16.gmra.mxu0 %v728
    %v774 = vpop.f32.mrf.mxu0
    %v775 = vadd.f32 %v690, %v774
    %v776 = vpop.f32.mrf.mxu0
    %v777 = vadd.f32 %v692, %v776
    %778 = vdwg.mxu0
    %v780 = vperm.slane %v550, 0
    %v782 = vadd.f32 %v740, %v780
    %v783 = vadd.f32 %v742, %v780
    %v784 = vadd.f32 %v745, %v780
    %v785 = vadd.f32 %v747, %v780
    %v786 = vadd.f32 %v750, %v780
    %v787 = vadd.f32 %v752, %v780
    %v788 = vadd.f32 %v755, %v780
    %v789 = vadd.f32 %v757, %v780
    %v790 = vadd.f32 %v760, %v780
    %v791 = vadd.f32 %v762, %v780
    %v792 = vadd.f32 %v765, %v780
    %v793 = vadd.f32 %v767, %v780
    %v794 = vadd.f32 %v770, %v780
    %v795 = vadd.f32 %v772, %v780
    %v796 = vadd.f32 %v775, %v780
    %v797 = vadd.f32 %v777, %v780
    %v798 = vpack.c.bf16 %v782, %v782
    %v799 = vpack.c.bf16 %v783, %v783
    %v800 = vpack.c.bf16 %v784, %v784
    %v801 = vpack.c.bf16 %v785, %v785
    %v802 = vpack.c.bf16 %v786, %v786
    %v803 = vpack.c.bf16 %v787, %v787
    %v804 = vpack.c.bf16 %v788, %v788
    %v805 = vpack.c.bf16 %v789, %v789
    %v806 = vpack.c.bf16 %v790, %v790
    %v807 = vpack.c.bf16 %v791, %v791
    %v808 = vpack.c.bf16 %v792, %v792
    %v809 = vpack.c.bf16 %v793, %v793
    %v810 = vpack.c.bf16 %v794, %v794
    %v811 = vpack.c.bf16 %v795, %v795
    %v812 = vpack.c.bf16 %v796, %v796
    %v813 = vpack.c.bf16 %v797, %v797
    %v814 = vunpack.c.l.bf16 %v798
    %v815 = vunpack.c.l.bf16 %v799
    %v816 = vunpack.c.l.bf16 %v800
    %v817 = vunpack.c.l.bf16 %v801
    %v818 = vunpack.c.l.bf16 %v802
    %v819 = vunpack.c.l.bf16 %v803
    %v820 = vunpack.c.l.bf16 %v804
    %v821 = vunpack.c.l.bf16 %v805
    %v822 = vunpack.c.l.bf16 %v806
    %v823 = vunpack.c.l.bf16 %v807
    %v824 = vunpack.c.l.bf16 %v808
    %v825 = vunpack.c.l.bf16 %v809
    %v826 = vunpack.c.l.bf16 %v810
    %v827 = vunpack.c.l.bf16 %v811
    %v828 = vunpack.c.l.bf16 %v812
    %v829 = vunpack.c.l.bf16 %v813
    %v830 = vmax.f32 %v814, 0.0
    %v831 = vmax.f32 %v815, 0.0
    %v832 = vmax.f32 %v816, 0.0
    %v833 = vmax.f32 %v817, 0.0
    %v834 = vmax.f32 %v818, 0.0
    %v835 = vmax.f32 %v819, 0.0
    %v836 = vmax.f32 %v820, 0.0
    %v837 = vmax.f32 %v821, 0.0
    %v838 = vmax.f32 %v822, 0.0
    %v839 = vmax.f32 %v823, 0.0
    %v840 = vmax.f32 %v824, 0.0
    %v841 = vmax.f32 %v825, 0.0
    %v842 = vmax.f32 %v826, 0.0
    %v843 = vmax.f32 %v827, 0.0
    %v844 = vmax.f32 %v828, 0.0
    %v845 = vmax.f32 %v829, 0.0
    %v846 = vpack.c.bf16 %v831, %v830
    %v847 = vpack.c.bf16 %v833, %v832
    %v848 = vpack.c.bf16 %v835, %v834
    %v849 = vpack.c.bf16 %v837, %v836
    %v850 = vpack.c.bf16 %v839, %v838
    %v851 = vpack.c.bf16 %v841, %v840
    %v852 = vpack.c.bf16 %v843, %v842
    %v853 = vpack.c.bf16 %v845, %v844
    %v854 = vld [vmem:[%s8] sm:$0xf]
    %v855 = vld [vmem:[%s8 + $0x4] sm:$0xf]
    %v856 = vld [vmem:[%s8 + $0x8] sm:$0xf]
    %v857 = vld [vmem:[%s8 + $0xc] sm:$0xf]
    %v858 = vld [vmem:[%s9] sm:$0xf]
    %v859 = vld [vmem:[%s9 + $0x4] sm:$0xf]
    %v860 = vld [vmem:[%s9 + $0x8] sm:$0xf]
    %v861 = vld [vmem:[%s9 + $0xc] sm:$0xf]
    %v862 = vld [vmem:[#allocation8] sm:$0x1]
    %v867 = vunpack.c.l.b16 %v854
    %v868 = vunpack.c.l.b16 %v855
    %v869 = vunpack.c.l.b16 %v856
    %v870 = vunpack.c.l.b16 %v857
    %v871 = vpack.c.b16 %v868, %v867
    %v872 = vpack.c.b16 %v870, %v869
    %v876 = vsel %vm620, %v846, 0
    %v879 = vsel %vm620, %v847, 0
    %v882 = vsel %vm620, %v848, 0
    %v885 = vsel %vm620, %v849, 0
    %v888 = vsel %vm620, %v850, 0
    %v891 = vsel %vm620, %v851, 0
    %v894 = vsel %vm620, %v852, 0
    %v897 = vsel %vm620, %v853, 0
    %899 = vmatpush.bf16.msra.mxu0 0
    %900 = vmatpush.bf16.msra.mxu0 0
    %901 = vmatpush.bf16.msra.mxu0 0
    %902 = vmatpush.bf16.msra.mxu0 0
    %903 = vmatpush.bf16.msra.mxu0 0
    %904 = vmatpush.bf16.msra.mxu0 0
    %905 = vmatpush.bf16.msra.mxu0 %v872
    %906 = vmatpush.bf16.msra.mxu0 %v871
    %907 = vmatmul.bf16.gmra.mxu0 %v876
    %v908 = vpop.f32.mrf.mxu0
    %v909 = vadd.f32 0.0, %v908
    %v910 = vpop.f32.mrf.mxu0
    %v911 = vadd.f32 0.0, %v910
    %912 = vmatmul.bf16.gmra.mxu0 %v879
    %v913 = vpop.f32.mrf.mxu0
    %v914 = vadd.f32 0.0, %v913
    %v915 = vpop.f32.mrf.mxu0
    %v916 = vadd.f32 0.0, %v915
    %917 = vmatmul.bf16.gmra.mxu0 %v882
    %v918 = vpop.f32.mrf.mxu0
    %v919 = vadd.f32 0.0, %v918
    %v920 = vpop.f32.mrf.mxu0
    %v921 = vadd.f32 0.0, %v920
    %922 = vmatmul.bf16.gmra.mxu0 %v885
    %v923 = vpop.f32.mrf.mxu0
    %v924 = vadd.f32 0.0, %v923
    %v925 = vpop.f32.mrf.mxu0
    %v926 = vadd.f32 0.0, %v925
    %927 = vmatmul.bf16.gmra.mxu0 %v888
    %v928 = vpop.f32.mrf.mxu0
    %v929 = vadd.f32 0.0, %v928
    %v930 = vpop.f32.mrf.mxu0
    %v931 = vadd.f32 0.0, %v930
    %932 = vmatmul.bf16.gmra.mxu0 %v891
    %v933 = vpop.f32.mrf.mxu0
    %v934 = vadd.f32 0.0, %v933
    %v935 = vpop.f32.mrf.mxu0
    %v936 = vadd.f32 0.0, %v935
    %937 = vmatmul.bf16.gmra.mxu0 %v894
    %v938 = vpop.f32.mrf.mxu0
    %v939 = vadd.f32 0.0, %v938
    %v940 = vpop.f32.mrf.mxu0
    %v941 = vadd.f32 0.0, %v940
    %942 = vmatmul.bf16.gmra.mxu0 %v897
    %v943 = vpop.f32.mrf.mxu0
    %v944 = vadd.f32 0.0, %v943
    %v945 = vpop.f32.mrf.mxu0
    %v946 = vadd.f32 0.0, %v945
    %947 = vdwg.mxu0
    %v948 = vpack.c.bf16 %v911, %v909
    %v949 = vpack.c.bf16 %v916, %v914
    %v950 = vpack.c.bf16 %v921, %v919
    %v951 = vpack.c.bf16 %v926, %v924
    %v952 = vpack.c.bf16 %v931, %v929
    %v953 = vpack.c.bf16 %v936, %v934
    %v954 = vpack.c.bf16 %v941, %v939
    %v955 = vpack.c.bf16 %v946, %v944
    %v960 = vunpack.c.l.b16 %v858
    %v961 = vunpack.c.l.b16 %v859
    %v962 = vunpack.c.l.b16 %v860
    %v963 = vunpack.c.l.b16 %v861
    %v964 = vpack.c.b16 %v961, %v960
    %v965 = vpack.c.b16 %v963, %v962
    %968 = vmatpush.bf16.msra.mxu0 0
    %969 = vmatpush.bf16.msra.mxu0 0
    %970 = vmatpush.bf16.msra.mxu0 0
    %971 = vmatpush.bf16.msra.mxu0 0
    %972 = vmatpush.bf16.msra.mxu0 0
    %973 = vmatpush.bf16.msra.mxu0 0
    %974 = vmatpush.bf16.msra.mxu0 %v965
    %975 = vmatpush.bf16.msra.mxu0 %v964
    %976 = vmatmul.bf16.gmra.mxu0 %v876
    %v977 = vpop.f32.mrf.mxu0
    %v978 = vadd.f32 0.0, %v977
    %v979 = vpop.f32.mrf.mxu0
    %v980 = vadd.f32 0.0, %v979
    %981 = vmatmul.bf16.gmra.mxu0 %v879
    %v982 = vpop.f32.mrf.mxu0
    %v983 = vadd.f32 0.0, %v982
    %v984 = vpop.f32.mrf.mxu0
    %v985 = vadd.f32 0.0, %v984
    %986 = vmatmul.bf16.gmra.mxu0 %v882
    %v987 = vpop.f32.mrf.mxu0
    %v988 = vadd.f32 0.0, %v987
    %v989 = vpop.f32.mrf.mxu0
    %v990 = vadd.f32 0.0, %v989
    %991 = vmatmul.bf16.gmra.mxu0 %v885
    %v992 = vpop.f32.mrf.mxu0
    %v993 = vadd.f32 0.0, %v992
    %v994 = vpop.f32.mrf.mxu0
    %v995 = vadd.f32 0.0, %v994
    %996 = vmatmul.bf16.gmra.mxu0 %v888
    %v997 = vpop.f32.mrf.mxu0
    %v998 = vadd.f32 0.0, %v997
    %v999 = vpop.f32.mrf.mxu0
    %v1000 = vadd.f32 0.0, %v999
    %1001 = vmatmul.bf16.gmra.mxu0 %v891
    %v1002 = vpop.f32.mrf.mxu0
    %v1003 = vadd.f32 0.0, %v1002
    %v1004 = vpop.f32.mrf.mxu0
    %v1005 = vadd.f32 0.0, %v1004
    %1006 = vmatmul.bf16.gmra.mxu0 %v894
    %v1007 = vpop.f32.mrf.mxu0
    %v1008 = vadd.f32 0.0, %v1007
    %v1009 = vpop.f32.mrf.mxu0
    %v1010 = vadd.f32 0.0, %v1009
    %1011 = vmatmul.bf16.gmra.mxu0 %v897
    %v1012 = vpop.f32.mrf.mxu0
    %v1013 = vadd.f32 0.0, %v1012
    %v1014 = vpop.f32.mrf.mxu0
    %v1015 = vadd.f32 0.0, %v1014
    %1016 = vdwg.mxu0
    %1017 = vmatpush.bf16.msra.mxu0 %v955
    %1018 = vmatpush.bf16.msra.mxu0 %v954
    %1019 = vmatpush.bf16.msra.mxu0 %v953
    %1020 = vmatpush.bf16.msra.mxu0 %v952
    %1021 = vmatpush.bf16.msra.mxu0 %v951
    %1022 = vmatpush.bf16.msra.mxu0 %v950
    %1023 = vmatpush.bf16.msra.mxu0 %v949
    %1024 = vmatpush.bf16.msra.mxu0 %v948
    %1025 = vmatmul.bf16.gmra.mxu0 %v192
    %v1026 = vpop.f32.mrf.mxu0
    %v1027 = vadd.f32 %v978, %v1026
    %v1028 = vpop.f32.mrf.mxu0
    %v1029 = vadd.f32 %v980, %v1028
    %1030 = vmatmul.bf16.gmra.mxu0 %v193
    %v1031 = vpop.f32.mrf.mxu0
    %v1032 = vadd.f32 %v983, %v1031
    %v1033 = vpop.f32.mrf.mxu0
    %v1034 = vadd.f32 %v985, %v1033
    %1035 = vmatmul.bf16.gmra.mxu0 %v194
    %v1036 = vpop.f32.mrf.mxu0
    %v1037 = vadd.f32 %v988, %v1036
    %v1038 = vpop.f32.mrf.mxu0
    %v1039 = vadd.f32 %v990, %v1038
    %1040 = vmatmul.bf16.gmra.mxu0 %v195
    %v1041 = vpop.f32.mrf.mxu0
    %v1042 = vadd.f32 %v993, %v1041
    %v1043 = vpop.f32.mrf.mxu0
    %v1044 = vadd.f32 %v995, %v1043
    %1045 = vmatmul.bf16.gmra.mxu0 %v196
    %v1046 = vpop.f32.mrf.mxu0
    %v1047 = vadd.f32 %v998, %v1046
    %v1048 = vpop.f32.mrf.mxu0
    %v1049 = vadd.f32 %v1000, %v1048
    %1050 = vmatmul.bf16.gmra.mxu0 %v197
    %v1051 = vpop.f32.mrf.mxu0
    %v1052 = vadd.f32 %v1003, %v1051
    %v1053 = vpop.f32.mrf.mxu0
    %v1054 = vadd.f32 %v1005, %v1053
    %1055 = vmatmul.bf16.gmra.mxu0 %v198
    %v1056 = vpop.f32.mrf.mxu0
    %v1057 = vadd.f32 %v1008, %v1056
    %v1058 = vpop.f32.mrf.mxu0
    %v1059 = vadd.f32 %v1010, %v1058
    %1060 = vmatmul.bf16.gmra.mxu0 %v199
    %v1061 = vpop.f32.mrf.mxu0
    %v1062 = vadd.f32 %v1013, %v1061
    %v1063 = vpop.f32.mrf.mxu0
    %v1064 = vadd.f32 %v1015, %v1063
    %1065 = vdwg.mxu0
    %v1067 = vperm.slane %v862, 0
    %v1069 = vadd.f32 %v1027, %v1067
    %v1070 = vadd.f32 %v1029, %v1067
    %v1071 = vadd.f32 %v1032, %v1067
    %v1072 = vadd.f32 %v1034, %v1067
    %v1073 = vadd.f32 %v1037, %v1067
    %v1074 = vadd.f32 %v1039, %v1067
    %v1075 = vadd.f32 %v1042, %v1067
    %v1076 = vadd.f32 %v1044, %v1067
    %v1077 = vadd.f32 %v1047, %v1067
    %v1078 = vadd.f32 %v1049, %v1067
    %v1079 = vadd.f32 %v1052, %v1067
    %v1080 = vadd.f32 %v1054, %v1067
    %v1081 = vadd.f32 %v1057, %v1067
    %v1082 = vadd.f32 %v1059, %v1067
    %v1083 = vadd.f32 %v1062, %v1067
    %v1084 = vadd.f32 %v1064, %v1067
    %v1085 = vpack.c.bf16 %v1069, %v1069
    %v1086 = vpack.c.bf16 %v1070, %v1070
    %v1087 = vpack.c.bf16 %v1071, %v1071
    %v1088 = vpack.c.bf16 %v1072, %v1072
    %v1089 = vpack.c.bf16 %v1073, %v1073
    %v1090 = vpack.c.bf16 %v1074, %v1074
    %v1091 = vpack.c.bf16 %v1075, %v1075
    %v1092 = vpack.c.bf16 %v1076, %v1076
    %v1093 = vpack.c.bf16 %v1077, %v1077
    %v1094 = vpack.c.bf16 %v1078, %v1078
    %v1095 = vpack.c.bf16 %v1079, %v1079
    %v1096 = vpack.c.bf16 %v1080, %v1080
    %v1097 = vpack.c.bf16 %v1081, %v1081
    %v1098 = vpack.c.bf16 %v1082, %v1082
    %v1099 = vpack.c.bf16 %v1083, %v1083
    %v1100 = vpack.c.bf16 %v1084, %v1084
    %v1101 = vunpack.c.l.bf16 %v1085
    %v1102 = vunpack.c.l.bf16 %v1086
    %v1103 = vunpack.c.l.bf16 %v1087
    %v1104 = vunpack.c.l.bf16 %v1088
    %v1105 = vunpack.c.l.bf16 %v1089
    %v1106 = vunpack.c.l.bf16 %v1090
    %v1107 = vunpack.c.l.bf16 %v1091
    %v1108 = vunpack.c.l.bf16 %v1092
    %v1109 = vunpack.c.l.bf16 %v1093
    %v1110 = vunpack.c.l.bf16 %v1094
    %v1111 = vunpack.c.l.bf16 %v1095
    %v1112 = vunpack.c.l.bf16 %v1096
    %v1113 = vunpack.c.l.bf16 %v1097
    %v1114 = vunpack.c.l.bf16 %v1098
    %v1115 = vunpack.c.l.bf16 %v1099
    %v1116 = vunpack.c.l.bf16 %v1100
    %v1117 = vmax.f32 %v1101, 0.0
    %v1118 = vmax.f32 %v1102, 0.0
    %v1119 = vmax.f32 %v1103, 0.0
    %v1120 = vmax.f32 %v1104, 0.0
    %v1121 = vmax.f32 %v1105, 0.0
    %v1122 = vmax.f32 %v1106, 0.0
    %v1123 = vmax.f32 %v1107, 0.0
    %v1124 = vmax.f32 %v1108, 0.0
    %v1125 = vmax.f32 %v1109, 0.0
    %v1126 = vmax.f32 %v1110, 0.0
    %v1127 = vmax.f32 %v1111, 0.0
    %v1128 = vmax.f32 %v1112, 0.0
    %v1129 = vmax.f32 %v1113, 0.0
    %v1130 = vmax.f32 %v1114, 0.0
    %v1131 = vmax.f32 %v1115, 0.0
    %v1132 = vmax.f32 %v1116, 0.0
    %v1133 = vpack.c.bf16 %v1118, %v1117
    %v1134 = vpack.c.bf16 %v1120, %v1119
    %v1135 = vpack.c.bf16 %v1122, %v1121
    %v1136 = vpack.c.bf16 %v1124, %v1123
    %v1137 = vpack.c.bf16 %v1126, %v1125
    %v1138 = vpack.c.bf16 %v1128, %v1127
    %v1139 = vpack.c.bf16 %v1130, %v1129
    %v1140 = vpack.c.bf16 %v1132, %v1131
    %v1141 = vld [vmem:[%s11] sm:$0xf]
    %v1142 = vld [vmem:[%s11 + $0x4] sm:$0xf]
    %v1143 = vld [vmem:[%s12] sm:$0xf]
    %v1144 = vld [vmem:[%s12 + $0x4] sm:$0xf]
    %v1145 = vld [vmem:[%s13] sm:$0x1]
    %1146 = vmatpush.bf16.msra.mxu0 %v1140
    %1147 = vmatpush.bf16.msra.mxu0 %v1139
    %1148 = vmatpush.bf16.msra.mxu0 %v1138
    %1149 = vmatpush.bf16.msra.mxu0 %v1137
    %1150 = vmatpush.bf16.msra.mxu0 %v1136
    %1151 = vmatpush.bf16.msra.mxu0 %v1135
    %1152 = vmatpush.bf16.msra.mxu0 %v1134
    %1153 = vmatpush.bf16.msra.mxu0 %v1133
    %1154 = vmatmul.bf16.gmra.mxu0 %v192
    %v1155 = vpop.f32.mrf.mxu0
    %v1156 = vadd.f32 0.0, %v1155
    %v1157 = vpop.f32.mrf.mxu0
    %v1158 = vadd.f32 0.0, %v1157
    %1159 = vmatmul.bf16.gmra.mxu0 %v193
    %v1160 = vpop.f32.mrf.mxu0
    %v1161 = vadd.f32 0.0, %v1160
    %v1162 = vpop.f32.mrf.mxu0
    %v1163 = vadd.f32 0.0, %v1162
    %1164 = vmatmul.bf16.gmra.mxu0 %v194
    %v1165 = vpop.f32.mrf.mxu0
    %v1166 = vadd.f32 0.0, %v1165
    %v1167 = vpop.f32.mrf.mxu0
    %v1168 = vadd.f32 0.0, %v1167
    %1169 = vmatmul.bf16.gmra.mxu0 %v195
    %v1170 = vpop.f32.mrf.mxu0
    %v1171 = vadd.f32 0.0, %v1170
    %v1172 = vpop.f32.mrf.mxu0
    %v1173 = vadd.f32 0.0, %v1172
    %1174 = vmatmul.bf16.gmra.mxu0 %v196
    %v1175 = vpop.f32.mrf.mxu0
    %v1176 = vadd.f32 0.0, %v1175
    %v1177 = vpop.f32.mrf.mxu0
    %v1178 = vadd.f32 0.0, %v1177
    %1179 = vmatmul.bf16.gmra.mxu0 %v197
    %v1180 = vpop.f32.mrf.mxu0
    %v1181 = vadd.f32 0.0, %v1180
    %v1182 = vpop.f32.mrf.mxu0
    %v1183 = vadd.f32 0.0, %v1182
    %1184 = vmatmul.bf16.gmra.mxu0 %v198
    %v1185 = vpop.f32.mrf.mxu0
    %v1186 = vadd.f32 0.0, %v1185
    %v1187 = vpop.f32.mrf.mxu0
    %v1188 = vadd.f32 0.0, %v1187
    %1189 = vmatmul.bf16.gmra.mxu0 %v199
    %v1190 = vpop.f32.mrf.mxu0
    %v1191 = vadd.f32 0.0, %v1190
    %v1192 = vpop.f32.mrf.mxu0
    %v1193 = vadd.f32 0.0, %v1192
    %1194 = vdwg.mxu0
    %v1195 = vpack.c.bf16 %v1158, %v1156
    %v1196 = vpack.c.bf16 %v1163, %v1161
    %v1197 = vpack.c.bf16 %v1168, %v1166
    %v1198 = vpack.c.bf16 %v1173, %v1171
    %v1199 = vpack.c.bf16 %v1178, %v1176
    %v1200 = vpack.c.bf16 %v1183, %v1181
    %v1201 = vpack.c.bf16 %v1188, %v1186
    %v1202 = vpack.c.bf16 %v1193, %v1191
    %v1205 = vunpack.c.l.b16 %v1143
    %v1206 = vunpack.c.l.b16 %v1144
    %v1207 = vpack.c.b16 %v1206, %v1205
    %vm1209 = vcmask 130048
    %v1211 = vsel %vm1209, %v1133, 0
    %v1214 = vsel %vm1209, %v1134, 0
    %v1217 = vsel %vm1209, %v1135, 0
    %v1220 = vsel %vm1209, %v1136, 0
    %v1223 = vsel %vm1209, %v1137, 0
    %v1226 = vsel %vm1209, %v1138, 0
    %v1229 = vsel %vm1209, %v1139, 0
    %v1232 = vsel %vm1209, %v1140, 0
    %1234 = vmatpush.bf16.msra.mxu0 0
    %1235 = vmatpush.bf16.msra.mxu0 0
    %1236 = vmatpush.bf16.msra.mxu0 0
    %1237 = vmatpush.bf16.msra.mxu0 0
    %1238 = vmatpush.bf16.msra.mxu0 0
    %1239 = vmatpush.bf16.msra.mxu0 0
    %1240 = vmatpush.bf16.msra.mxu0 0
    %1241 = vmatpush.bf16.msra.mxu0 %v1207
    %1242 = vmatmul.bf16.gmra.mxu0 %v1211
    %v1243 = vpop.f32.mrf.mxu0
    %v1244 = vadd.f32 0.0, %v1243
    %v1245 = vpop.f32.mrf.mxu0
    %v1246 = vadd.f32 0.0, %v1245
    %1247 = vmatmul.bf16.gmra.mxu0 %v1214
    %v1248 = vpop.f32.mrf.mxu0
    %v1249 = vadd.f32 0.0, %v1248
    %v1250 = vpop.f32.mrf.mxu0
    %v1251 = vadd.f32 0.0, %v1250
    %1252 = vmatmul.bf16.gmra.mxu0 %v1217
    %v1253 = vpop.f32.mrf.mxu0
    %v1254 = vadd.f32 0.0, %v1253
    %v1255 = vpop.f32.mrf.mxu0
    %v1256 = vadd.f32 0.0, %v1255
    %1257 = vmatmul.bf16.gmra.mxu0 %v1220
    %v1258 = vpop.f32.mrf.mxu0
    %v1259 = vadd.f32 0.0, %v1258
    %v1260 = vpop.f32.mrf.mxu0
    %v1261 = vadd.f32 0.0, %v1260
    %1262 = vmatmul.bf16.gmra.mxu0 %v1223
    %v1263 = vpop.f32.mrf.mxu0
    %v1264 = vadd.f32 0.0, %v1263
    %v1265 = vpop.f32.mrf.mxu0
    %v1266 = vadd.f32 0.0, %v1265
    %1267 = vmatmul.bf16.gmra.mxu0 %v1226
    %v1268 = vpop.f32.mrf.mxu0
    %v1269 = vadd.f32 0.0, %v1268
    %v1270 = vpop.f32.mrf.mxu0
    %v1271 = vadd.f32 0.0, %v1270
    %1272 = vmatmul.bf16.gmra.mxu0 %v1229
    %v1273 = vpop.f32.mrf.mxu0
    %v1274 = vadd.f32 0.0, %v1273
    %v1275 = vpop.f32.mrf.mxu0
    %v1276 = vadd.f32 0.0, %v1275
    %1277 = vmatmul.bf16.gmra.mxu0 %v1232
    %v1278 = vpop.f32.mrf.mxu0
    %v1279 = vadd.f32 0.0, %v1278
    %v1280 = vpop.f32.mrf.mxu0
    %v1281 = vadd.f32 0.0, %v1280
    %1282 = vdwg.mxu0
    %v1285 = vunpack.c.l.b16 %v1141
    %v1286 = vunpack.c.l.b16 %v1142
    %v1287 = vpack.c.b16 %v1286, %v1285
    %v1290 = vsel %vm1209, %v1195, 0
    %v1293 = vsel %vm1209, %v1196, 0
    %v1296 = vsel %vm1209, %v1197, 0
    %v1299 = vsel %vm1209, %v1198, 0
    %v1302 = vsel %vm1209, %v1199, 0
    %v1305 = vsel %vm1209, %v1200, 0
    %v1308 = vsel %vm1209, %v1201, 0
    %v1311 = vsel %vm1209, %v1202, 0
    %1313 = vmatpush.bf16.msra.mxu0 0
    %1314 = vmatpush.bf16.msra.mxu0 0
    %1315 = vmatpush.bf16.msra.mxu0 0
    %1316 = vmatpush.bf16.msra.mxu0 0
    %1317 = vmatpush.bf16.msra.mxu0 0
    %1318 = vmatpush.bf16.msra.mxu0 0
    %1319 = vmatpush.bf16.msra.mxu0 0
    %1320 = vmatpush.bf16.msra.mxu0 %v1287
    %1321 = vmatmul.bf16.gmra.mxu0 %v1290
    %v1322 = vpop.f32.mrf.mxu0
    %v1323 = vadd.f32 %v1244, %v1322
    %v1324 = vpop.f32.mrf.mxu0
    %v1325 = vadd.f32 %v1246, %v1324
    %1326 = vmatmul.bf16.gmra.mxu0 %v1293
    %v1327 = vpop.f32.mrf.mxu0
    %v1328 = vadd.f32 %v1249, %v1327
    %v1329 = vpop.f32.mrf.mxu0
    %v1330 = vadd.f32 %v1251, %v1329
    %1331 = vmatmul.bf16.gmra.mxu0 %v1296
    %v1332 = vpop.f32.mrf.mxu0
    %v1333 = vadd.f32 %v1254, %v1332
    %v1334 = vpop.f32.mrf.mxu0
    %v1335 = vadd.f32 %v1256, %v1334
    %1336 = vmatmul.bf16.gmra.mxu0 %v1299
    %v1337 = vpop.f32.mrf.mxu0
    %v1338 = vadd.f32 %v1259, %v1337
    %v1339 = vpop.f32.mrf.mxu0
    %v1340 = vadd.f32 %v1261, %v1339
    %1341 = vmatmul.bf16.gmra.mxu0 %v1302
    %v1342 = vpop.f32.mrf.mxu0
    %v1343 = vadd.f32 %v1264, %v1342
    %v1344 = vpop.f32.mrf.mxu0
    %v1345 = vadd.f32 %v1266, %v1344
    %1346 = vmatmul.bf16.gmra.mxu0 %v1305
    %v1347 = vpop.f32.mrf.mxu0
    %v1348 = vadd.f32 %v1269, %v1347
    %v1349 = vpop.f32.mrf.mxu0
    %v1350 = vadd.f32 %v1271, %v1349
    %1351 = vmatmul.bf16.gmra.mxu0 %v1308
    %v1352 = vpop.f32.mrf.mxu0
    %v1353 = vadd.f32 %v1274, %v1352
    %v1354 = vpop.f32.mrf.mxu0
    %v1355 = vadd.f32 %v1276, %v1354
    %1356 = vmatmul.bf16.gmra.mxu0 %v1311
    %v1357 = vpop.f32.mrf.mxu0
    %v1358 = vadd.f32 %v1279, %v1357
    %v1359 = vpop.f32.mrf.mxu0
    %v1360 = vadd.f32 %v1281, %v1359
    %1361 = vdwg.mxu0
    %v1363 = vperm.slane %v1145, 0
    %v1365 = vadd.f32 %v1323, %v1363
    %v1366 = vadd.f32 %v1325, %v1363
    %v1367 = vadd.f32 %v1328, %v1363
    %v1368 = vadd.f32 %v1330, %v1363
    %v1369 = vadd.f32 %v1333, %v1363
    %v1370 = vadd.f32 %v1335, %v1363
    %v1371 = vadd.f32 %v1338, %v1363
    %v1372 = vadd.f32 %v1340, %v1363
    %v1373 = vadd.f32 %v1343, %v1363
    %v1374 = vadd.f32 %v1345, %v1363
    %v1375 = vadd.f32 %v1348, %v1363
    %v1376 = vadd.f32 %v1350, %v1363
    %v1377 = vadd.f32 %v1353, %v1363
    %v1378 = vadd.f32 %v1355, %v1363
    %v1379 = vadd.f32 %v1358, %v1363
    %v1380 = vadd.f32 %v1360, %v1363
    %v1381 = vpack.c.bf16 %v1366, %v1365
    %v1382 = vpack.c.bf16 %v1368, %v1367
    %v1383 = vpack.c.bf16 %v1370, %v1369
    %v1384 = vpack.c.bf16 %v1372, %v1371
    %v1385 = vpack.c.bf16 %v1374, %v1373
    %v1386 = vpack.c.bf16 %v1376, %v1375
    %v1387 = vpack.c.bf16 %v1378, %v1377
    %v1388 = vpack.c.bf16 %v1380, %v1379
    %v1389 = vld [vmem:[#allocation10] sm:$0xf]
    %v1390 = vld [vmem:[#allocation10 + $0x4] sm:$0xf]
    %v1391 = vld [vmem:[%s15] sm:$0x1]
    %v1393 = vperm.slane %v1391, 0
    %v1397 = vunpack.c.l.b16 %v1389
    %v1398 = vunpack.c.l.b16 %v1390
    %v1399 = vpack.c.b16 %v1398, %v1397
    %v1402 = vsel %vm1209, %v1381, 0
    %v1405 = vsel %vm1209, %v1382, 0
    %v1408 = vsel %vm1209, %v1383, 0
    %v1411 = vsel %vm1209, %v1384, 0
    %v1414 = vsel %vm1209, %v1385, 0
    %v1417 = vsel %vm1209, %v1386, 0
    %v1420 = vsel %vm1209, %v1387, 0
    %v1423 = vsel %vm1209, %v1388, 0
    %1425 = vmatpush.bf16.msra.mxu0 0
    %1426 = vmatpush.bf16.msra.mxu0 0
    %1427 = vmatpush.bf16.msra.mxu0 0
    %1428 = vmatpush.bf16.msra.mxu0 0
    %1429 = vmatpush.bf16.msra.mxu0 0
    %1430 = vmatpush.bf16.msra.mxu0 0
    %1431 = vmatpush.bf16.msra.mxu0 0
    %1432 = vmatpush.bf16.msra.mxu0 %v1399
    %1433 = vmatmul.bf16.gmra.mxu0 %v1402
    %v1434 = vpop.f32.mrf.mxu0
    %v1435 = vadd.f32 %v1393, %v1434
    %v1436 = vpop.f32.mrf.mxu0
    %v1437 = vadd.f32 %v1393, %v1436
    %1438 = vmatmul.bf16.gmra.mxu0 %v1405
    %v1439 = vpop.f32.mrf.mxu0
    %v1440 = vadd.f32 %v1393, %v1439
    %v1441 = vpop.f32.mrf.mxu0
    %v1442 = vadd.f32 %v1393, %v1441
    %1443 = vmatmul.bf16.gmra.mxu0 %v1408
    %v1444 = vpop.f32.mrf.mxu0
    %v1445 = vadd.f32 %v1393, %v1444
    %v1446 = vpop.f32.mrf.mxu0
    %v1447 = vadd.f32 %v1393, %v1446
    %1448 = vmatmul.bf16.gmra.mxu0 %v1411
    %v1449 = vpop.f32.mrf.mxu0
    %v1450 = vadd.f32 %v1393, %v1449
    %v1451 = vpop.f32.mrf.mxu0
    %v1452 = vadd.f32 %v1393, %v1451
    %1453 = vmatmul.bf16.gmra.mxu0 %v1414
    %v1454 = vpop.f32.mrf.mxu0
    %v1455 = vadd.f32 %v1393, %v1454
    %v1456 = vpop.f32.mrf.mxu0
    %v1457 = vadd.f32 %v1393, %v1456
    %1458 = vmatmul.bf16.gmra.mxu0 %v1417
    %v1459 = vpop.f32.mrf.mxu0
    %v1460 = vadd.f32 %v1393, %v1459
    %v1461 = vpop.f32.mrf.mxu0
    %v1462 = vadd.f32 %v1393, %v1461
    %1463 = vmatmul.bf16.gmra.mxu0 %v1420
    %v1464 = vpop.f32.mrf.mxu0
    %v1465 = vadd.f32 %v1393, %v1464
    %v1466 = vpop.f32.mrf.mxu0
    %v1467 = vadd.f32 %v1393, %v1466
    %1468 = vmatmul.bf16.gmra.mxu0 %v1423
    %v1469 = vpop.f32.mrf.mxu0
    %v1470 = vadd.f32 %v1393, %v1469
    %v1471 = vpop.f32.mrf.mxu0
    %v1472 = vadd.f32 %v1393, %v1471
    %1473 = vdwg.mxu0
    %v1474 = vpack.c.bf16 %v1435, %v1435
    %v1475 = vpack.c.bf16 %v1437, %v1437
    %v1476 = vpack.c.bf16 %v1440, %v1440
    %v1477 = vpack.c.bf16 %v1442, %v1442
    %v1478 = vpack.c.bf16 %v1445, %v1445
    %v1479 = vpack.c.bf16 %v1447, %v1447
    %v1480 = vpack.c.bf16 %v1450, %v1450
    %v1481 = vpack.c.bf16 %v1452, %v1452
    %v1482 = vpack.c.bf16 %v1455, %v1455
    %v1483 = vpack.c.bf16 %v1457, %v1457
    %v1484 = vpack.c.bf16 %v1460, %v1460
    %v1485 = vpack.c.bf16 %v1462, %v1462
    %v1486 = vpack.c.bf16 %v1465, %v1465
    %v1487 = vpack.c.bf16 %v1467, %v1467
    %v1488 = vpack.c.bf16 %v1470, %v1470
    %v1489 = vpack.c.bf16 %v1472, %v1472
    %1490 = vst [vmem:[#allocation11] sm:$0xf] %v1474
    %1491 = vst [vmem:[#allocation11 + $0x4] sm:$0xf] %v1475
    %1492 = vst [vmem:[#allocation11 + $0x8] sm:$0xf] %v1476
    %1493 = vst [vmem:[#allocation11 + $0xc] sm:$0xf] %v1477
    %1494 = vst [vmem:[#allocation11 + $0x10] sm:$0xf] %v1478
    %1495 = vst [vmem:[#allocation11 + $0x14] sm:$0xf] %v1479
    %1496 = vst [vmem:[#allocation11 + $0x18] sm:$0xf] %v1480
    %1497 = vst [vmem:[#allocation11 + $0x1c] sm:$0xf] %v1481
    %1498 = vst [vmem:[#allocation11 + $0x20] sm:$0xf] %v1482
    %1499 = vst [vmem:[#allocation11 + $0x24] sm:$0xf] %v1483
    %1500 = vst [vmem:[#allocation11 + $0x28] sm:$0xf] %v1484
    %1501 = vst [vmem:[#allocation11 + $0x2c] sm:$0xf] %v1485
    %1502 = vst [vmem:[#allocation11 + $0x30] sm:$0xf] %v1486
    %1503 = vst [vmem:[#allocation11 + $0x34] sm:$0xf] %v1487
    %1504 = vst [vmem:[#allocation11 + $0x38] sm:$0xf] %v1488
    %1505 = vst [vmem:[#allocation11 + $0x3c] sm:$0xf] %v1489
    // Predicated region
    $region86: #{tpu_custom_call.1} parent=1 // pred_check
      _
    $region87: #{tpu_custom_call.1} parent=1 // pred_check_branch
      %1507 = sbr.rel (0) target = $region89
    $region88: #{tpu_custom_call.1} parent=1 // pred_region
      %1509 = vsyncadd [#allocation4], 0
      %s1510 = sshll.u32 [#allocation11], 4
      %s1511 = int_to_ptr.vmem [resolvable:$true] %s1510
      %s1512 = sshll.u32 %s16, 4
      %s1513 = int_to_ptr.hbm [resolvable:$true] %s1512
      %1518 = dma.vmem_to_hbm [thread:$0]  %s1511, 1024, %s1513, [#allocation4], 64, 64, 4
    $region89: #{tpu_custom_call.1} parent=1 // pred_fallthru
      _
    // Predicated region
    $region90: #{tpu_custom_call.1} parent=1 // pred_check
      _
    $region91: #{tpu_custom_call.1} parent=1 // pred_check_branch
      %1520 = sbr.rel (0) target = $region93
    $region92: #{tpu_custom_call.1} parent=1 // pred_region
      %1522 = dma.done [#allocation4], 1024
    $region93: #{tpu_custom_call.1} parent=1 // pred_fallthru
      _
    %1523 = vsyncpa [#allocation3], 1
    %1524 = vsyncpa [#allocation6], 1
    %1525 = vsyncpa [#allocation9], 1
    %1526 = vsyncpa [#allocation4], 1

</llo_original>
